<compile_context>
chip_gen: v7x
topology: tpu7x:2x2x1
jax: 0.10.0
libtpu: 0.0.40
codegen_flags: <defaults>
</compile_context>

<pallas_src>
import jax
import jax.numpy as jnp
from jax import lax
from jax.experimental import pallas as pl
from jax.experimental.pallas import tpu as pltpu

_EPS = 1e-5
_LANE = 128
_SUB = 8


def _rup(n, m):
    return (n + m - 1) // m * m


def _dot(a, b):
    return jnp.dot(a, b, preferred_element_type=jnp.float32)


# --------------------------------------------------------------------- one-time prep
def prepare_lf_dnn(params):
    """One-time host-side prep (call once, cache the result).

    Folds eval-mode BatchNorm into scale/shift, packs audio/video weights as
    block-diagonal matrices, lane-replicates the 1-wide output head, and row-stacks
    every parameter (8-sublane-aligned, zero-padded to 128 lanes) into one f32 slab.
    Returns (slab, layout, dims) where layout maps name -> (row_off, rows, cols).
    """
    pa, pv, pt, pp = params["audio"], params["video"], params["text"], params["post"]

    da, ha = pa["w1"].shape
    dv, hv = pv["w1"].shape
    dt = pt["w_ih"].shape[0]
    H = pt["w_hh"].shape[0]
    tout = pt["w_out"].shape[1]
    fus = ha + hv + tout
    pf = pp["w1"].shape[1]
    assert pp["w1"].shape[0] == fus
    out_w = _rup(fus + 1, _LANE)
    mpad = out_w - fus                      # lanes carrying the replicated scalar M

    def bn_fold(p):                         # eval-mode BN: y = x*scale + shift
        scale = p["gamma"] / jnp.sqrt(p["var"] + _EPS)
        return scale, p["beta"] - p["mean"] * scale

    a_sc, a_sh = bn_fold(pa)
    v_sc, v_sh = bn_fold(pv)

    def blockdiag(wa, wv):
        ra, ca = wa.shape
        rv, cv = wv.shape
        top = jnp.concatenate([wa, jnp.zeros((ra, cv), wa.dtype)], axis=1)
        bot = jnp.concatenate([jnp.zeros((rv, ca), wv.dtype), wv], axis=1)
        return jnp.concatenate([top, bot], axis=0)

    segs = {
        # text LSTM
        "w_ih": pt["w_ih"],                                       # (dt, 4H)
        "w_hh": pt["w_hh"],                                       # (H, 4H)  gate-concat
        "bg": pt["b"],                                            # (1, 4H)  b_ih + b_hh
        "w_out": pt["w_out"],                                     # (H, tout)
        "b_out": pt["b_out"],                                     # (1, tout)
        # audio + video SubNets, block-diagonal (out lanes = [audio | video])
        "av_scale": jnp.concatenate([a_sc, v_sc], axis=1),        # (1, da+dv)
        "av_shift": jnp.concatenate([a_sh, v_sh], axis=1),
        "avw1": blockdiag(pa["w1"], pv["w1"]),                    # (da+dv, ha+hv)
        "avb1": jnp.concatenate([pa["b1"], pv["b1"]], axis=1),
        "avw2": blockdiag(pa["w2"], pv["w2"]),                    # (ha+hv, ha+hv)
        "avb2": jnp.concatenate([pa["b2"], pv["b2"]], axis=1),
        "avw3": blockdiag(pa["w3"], pv["w3"]),
        "avb3": jnp.concatenate([pa["b3"], pv["b3"]], axis=1),
        # post-fusion MLP (pw3/pb3 lane-replicated: all mpad columns are identical, the
        # host reads only column `fus` -- do NOT add per-column noise here)
        "pw1": pp["w1"],                                          # (fus, pf)
        "pb1": pp["b1"],
        "pw2": pp["w2"],                                          # (pf, pf)
        "pb2": pp["b2"],
        "pw3": jnp.tile(pp["w3"], (1, mpad)),                     # (pf, mpad)
        "pb3": jnp.tile(pp["b3"], (1, mpad)),
    }

    layout = {}
    rows = []
    off = 0
    for name, arr in segs.items():
        r, c = arr.shape
        rpad = _rup(r, _SUB)                # keep every segment 8-sublane aligned
        layout[name] = (off, r, c)
        rows.append(jnp.pad(arr.astype(jnp.float32),
                            ((0, rpad - r), (0, _LANE - c))))
        off += rpad
    slab = jnp.concatenate(rows, axis=0)    # (R, 128) single parameter operand

    dims = dict(da=da, dv=dv, ha=ha, hv=hv, dt=dt, H=H, tout=tout,
                fus=fus, pf=pf, out_w=out_w, mpad=mpad)
    return slab, layout, dims


# ------------------------------------------------------------------- fused forward
def make_lf_dnn_forward(layout, dims):
    ha, hv = dims["ha"], dims["hv"]
    H, tout, fus, out_w = dims["H"], dims["tout"], dims["fus"], dims["out_w"]

    @jax.jit
    def forward(text_x, audio_x, video_x, slab):
        B, T, Din = text_x.shape
        BP = _rup(B, _SUB)                  # pad batch rows so LSTM tiles are aligned

        # time-major, batch padded to a whole sublane group, flattened to 2D
        tx = jnp.transpose(text_x, (1, 0, 2))                     # (T, B, Din)
        if BP != B:
            tx = jnp.pad(tx, ((0, 0), (0, BP - B), (0, 0)))
        tx2d = tx.reshape(T * BP, Din)

        av_in = jnp.concatenate([jnp.squeeze(audio_x, 1),
                                 jnp.squeeze(video_x, 1)], axis=-1)  # (B, da+dv)

        def kernel(tx_ref, av_ref, p_ref, out_ref):
            def seg(name):
                off, r, c = layout[name]
                return p_ref[off:off + r, :c]

            # -------- audio + video SubNets (block-diagonal, BN folded) --------
            xn = av_ref[...] * seg("av_scale") + seg("av_shift")
            y = jnp.maximum(_dot(xn, seg("avw1")) + seg("avb1"), 0.0)
            y = jnp.maximum(_dot(y, seg("avw2")) + seg("avb2"), 0.0)
            av_h = jnp.maximum(_dot(y, seg("avw3")) + seg("avb3"), 0.0)  # [audio_h|video_h]

            # -------- text SubNet: single-layer LSTM + output Linear --------
            # hoisted input projection: one well-shaped MXU matmul + bias
            gx = _dot(tx_ref[...], seg("w_ih")) + seg("bg")       # (T*BP, 4H)
            w_hh = seg("w_hh")                                    # (H, 4H) gate-concat
            h = jnp.zeros((BP, H), jnp.float32)
            c = jnp.zeros((BP, H), jnp.float32)
            # T is static: fully unroll; every slice is a static, sublane-aligned index;
            # one recurrent matmul per step, gates split by lane slices (idle XLU slot).
            for t in range(T):
                g = gx[t * BP:(t + 1) * BP, :] + _dot(h, w_hh)    # (BP, 4H)
                ii = jax.nn.sigmoid(g[:, 0 * H:1 * H])
                ff = jax.nn.sigmoid(g[:, 1 * H:2 * H])
                gg = jnp.tanh(g[:, 2 * H:3 * H])
                oo = jax.nn.sigmoid(g[:, 3 * H:4 * H])
                c = ff * c + ii * gg
                h = oo * jnp.tanh(c)
            text_h = _dot(h[:B], seg("w_out")) + seg("b_out")     # (B, tout)

            # -------- post-fusion MLP (dropout = identity in eval) --------
            fusion = jnp.concatenate([av_h, text_h], axis=-1)     # (B, fus)
            z = jnp.maximum(_dot(fusion, seg("pw1")) + seg("pb1"), 0.0)
            z = jnp.maximum(_dot(z, seg("pw2")) + seg("pb2"), 0.0)
            m_block = _dot(z, seg("pw3")) + seg("pb3")            # (B, mpad), lanes == M
            out_ref[...] = jnp.concatenate([fusion, m_block], axis=-1)   # (B, out_w)

        packed = pl.pallas_call(
            kernel,
            out_shape=jax.ShapeDtypeStruct((B, out_w), jnp.float32),
            in_specs=[pl.BlockSpec(memory_space=pltpu.MemorySpace.VMEM)] * 3,
            out_specs=pl.BlockSpec(memory_space=pltpu.MemorySpace.VMEM),
        )(tx2d, av_in, slab)

        audio_h = packed[:, :ha]
        video_h = packed[:, ha:ha + hv]
        text_h = packed[:, ha + hv:fus]
        fusion_h = packed[:, :fus]
        output = packed[:, fus:fus + 1]
        return {"Feature_t": text_h, "Feature_a": audio_h, "Feature_v": video_h,
                "Feature_f": fusion_h, "M": output}

    return forward


# ----------------------------------------------------------------- pure-JAX reference
def _ref_subnet(x, p):
    xn = (x - p["mean"]) / jnp.sqrt(p["var"] + _EPS) * p["gamma"] + p["beta"]
    y = jax.nn.relu(xn @ p["w1"] + p["b1"])
    y = jax.nn.relu(y @ p["w2"] + p["b2"])
    return jax.nn.relu(y @ p["w3"] + p["b3"])


def _ref_text_subnet(x_tm, p):
    T, B, _ = x_tm.shape
    H = p["w_hh"].shape[0]

    def step(carry, x_t):
        h, c = carry
        gates = x_t @ p["w_ih"] + h @ p["w_hh"] + p["b"]
        i = jax.nn.sigmoid(gates[:, 0 * H:1 * H])
        f = jax.nn.sigmoid(gates[:, 1 * H:2 * H])
        g = jnp.tanh(gates[:, 2 * H:3 * H])
        o = jax.nn.sigmoid(gates[:, 3 * H:4 * H])
        c = f * c + i * g
        h = o * jnp.tanh(c)
        return (h, c), None

    (h, _), _ = lax.scan(step, (jnp.zeros((B, H)), jnp.zeros((B, H))), x_tm)
    return h @ p["w_out"] + p["b_out"]


def _ref_forward(text_x, audio_x, video_x, params):
    a = _ref_subnet(jnp.squeeze(audio_x, 1), params["audio"])
    v = _ref_subnet(jnp.squeeze(video_x, 1), params["video"])
    t = _ref_text_subnet(jnp.transpose(text_x, (1, 0, 2)), params["text"])
    f = jnp.concatenate([a, v, t], axis=-1)
    p = params["post"]
    x = jax.nn.relu(f @ p["w1"] + p["b1"])
    x = jax.nn.relu(x @ p["w2"] + p["b2"])
    m = x @ p["w3"] + p["b3"]
    return {"Feature_t": t, "Feature_a": a, "Feature_v": v, "Feature_f": f, "M": m}


# ------------------------------------------------------------------------------ params
def _init_linear(key, d_in, d_out):
    k1, k2 = jax.random.split(key)
    bound = 1.0 / jnp.sqrt(d_in)
    w = jax.random.uniform(k1, (d_in, d_out), jnp.float32, -bound, bound)
    b = jax.random.uniform(k2, (1, d_out), jnp.float32, -bound, bound)
    return w, b


def _init_subnet(key, d_in, hidden):
    ks = jax.random.split(key, 5)
    w1, b1 = _init_linear(ks[0], d_in, hidden)
    w2, b2 = _init_linear(ks[1], hidden, hidden)
    w3, b3 = _init_linear(ks[2], hidden, hidden)
    return {
        "gamma": jnp.ones((1, d_in), jnp.float32),
        "beta": jnp.zeros((1, d_in), jnp.float32),
        "mean": 0.1 * jax.random.normal(ks[3], (1, d_in), jnp.float32),
        "var": jax.random.uniform(ks[4], (1, d_in), jnp.float32, 0.5, 1.5),
        "w1": w1, "b1": b1, "w2": w2, "b2": b2, "w3": w3, "b3": b3,
    }


def _init_text_subnet(key, d_in, hidden, out):
    ks = jax.random.split(key, 4)
    bound = 1.0 / jnp.sqrt(hidden)
    w_ih = jax.random.uniform(ks[0], (d_in, 4 * hidden), jnp.float32, -bound, bound)
    w_hh = jax.random.uniform(ks[1], (hidden, 4 * hidden), jnp.float32, -bound, bound)
    b = jax.random.uniform(ks[2], (1, 4 * hidden), jnp.float32, -bound, bound)  # b_ih+b_hh
    w_out, b_out = _init_linear(ks[3], hidden, out)
    return {"w_ih": w_ih, "w_hh": w_hh, "b": b, "w_out": w_out, "b_out": b_out}


def _init_post_fusion(key, fusion_dim, pf_dim):
    ks = jax.random.split(key, 3)
    w1, b1 = _init_linear(ks[0], fusion_dim, pf_dim)
    w2, b2 = _init_linear(ks[1], pf_dim, pf_dim)
    w3, b3 = _init_linear(ks[2], pf_dim, 1)
    return {"w1": w1, "b1": b1, "w2": w2, "b2": b2, "w3": w3, "b3": b3}


# -------------------------------------------------------------------------------- main
if __name__ == "__main__":
    # args.feature_dims=(16, 8, 8), args.hidden_dims=(32, 16, 16),
    # args.text_out=32, args.post_fusion_dim=32, dropouts irrelevant in eval.
    B, T = 4, 8
    text_in, audio_in, video_in = 16, 8, 8
    text_hidden, audio_hidden, video_hidden = 32, 16, 16
    text_out, post_fusion_dim = 32, 32
    fusion_dim = text_out + video_hidden + audio_hidden

    key = jax.random.PRNGKey(0)
    k_in, k_a, k_v, k_t, k_p = jax.random.split(key, 5)
    k_tx, k_ax, k_vx = jax.random.split(k_in, 3)

    text_x = jax.random.normal(k_tx, (B, T, text_in), jnp.float32)
    audio_x = jax.random.normal(k_ax, (B, 1, audio_in), jnp.float32)
    video_x = jax.random.normal(k_vx, (B, 1, video_in), jnp.float32)

    params = {
        "audio": _init_subnet(k_a, audio_in, audio_hidden),
        "video": _init_subnet(k_v, video_in, video_hidden),
        "text": _init_text_subnet(k_t, text_in, text_hidden, text_out),
        "post": _init_post_fusion(k_p, fusion_dim, post_fusion_dim),
    }

    # One-time prep (BN fold, block-diag packing, single param slab) -- cached, NOT on
    # the per-call path.
    slab, layout, dims = prepare_lf_dnn(params)
    lf_dnn_forward = make_lf_dnn_forward(layout, dims)

    res = lf_dnn_forward(text_x, audio_x, video_x, slab)
    jax.block_until_ready(res)

    ref = _ref_forward(text_x, audio_x, video_x, params)
    for name in ("Feature_a", "Feature_v", "Feature_t", "Feature_f", "M"):
        assert res[name].shape == ref[name].shape, name
        assert jnp.allclose(res[name], ref[name], atol=2e-3, rtol=2e-3), name

    # TODO(synk): training-mode Dropout / BatchNorm batch-statistics are not modeled
    # (eval-mode forward semantics only).
    print("KERNEL_OK")
</pallas_src>

<mosaic_0001>
module attributes {stable_mosaic.version = 11 : i64} {
  func.func @kernel(%arg0: memref<64x16xf32, #tpu.memory_space<vmem>>, %arg1: memref<4x16xf32, #tpu.memory_space<vmem>>, %arg2: memref<368x128xf32, #tpu.memory_space<vmem>>, %arg3: memref<4x128xf32, #tpu.memory_space<vmem>>) attributes {dimension_semantics = [], scalar_prefetch = 0 : i64, scratch_operands = 0 : i64, tpu.core_type = #tpu.core_type<tc>} {
    %c0 = arith.constant 0 : index
    %c0_0 = arith.constant 0 : index
    %0 = vector.load %arg1[%c0, %c0_0] : memref<4x16xf32, #tpu.memory_space<vmem>>, vector<4x16xf32>
    %c96 = arith.constant 96 : index
    %c0_1 = arith.constant 0 : index
    %1 = vector.load %arg2[%c96, %c0_1] : memref<368x128xf32, #tpu.memory_space<vmem>>, vector<1x16xf32>
    %2 = vector.broadcast %1 : vector<1x16xf32> to vector<4x16xf32>
    %3 = arith.mulf %0, %2 : vector<4x16xf32>
    %c104 = arith.constant 104 : index
    %c0_2 = arith.constant 0 : index
    %4 = vector.load %arg2[%c104, %c0_2] : memref<368x128xf32, #tpu.memory_space<vmem>>, vector<1x16xf32>
    %5 = vector.broadcast %4 : vector<1x16xf32> to vector<4x16xf32>
    %6 = arith.addf %3, %5 : vector<4x16xf32>
    %c112 = arith.constant 112 : index
    %c0_3 = arith.constant 0 : index
    %7 = vector.load %arg2[%c112, %c0_3] : memref<368x128xf32, #tpu.memory_space<vmem>>, vector<16x32xf32>
    %cst = arith.constant dense<0.000000e+00> : vector<4x32xf32>
    %8 = tpu.matmul %6, %7, %cst {dimension_numbers = #tpu.dot_dimension_numbers<[1], [0], [0], [1], [0, 0, 1, 1], [], []>} : vector<4x16xf32>, vector<16x32xf32>, vector<4x32xf32> -> vector<4x32xf32>
    %c128 = arith.constant 128 : index
    %c0_4 = arith.constant 0 : index
    %9 = vector.load %arg2[%c128, %c0_4] : memref<368x128xf32, #tpu.memory_space<vmem>>, vector<1x32xf32>
    %10 = vector.broadcast %9 : vector<1x32xf32> to vector<4x32xf32>
    %11 = arith.addf %8, %10 : vector<4x32xf32>
    %cst_5 = arith.constant 0.000000e+00 : f32
    %12 = vector.broadcast %cst_5 : f32 to vector<4x32xf32>
    %13 = arith.maximumf %11, %12 : vector<4x32xf32>
    %c136 = arith.constant 136 : index
    %c0_6 = arith.constant 0 : index
    %14 = vector.load %arg2[%c136, %c0_6] : memref<368x128xf32, #tpu.memory_space<vmem>>, vector<32x32xf32>
    %cst_7 = arith.constant dense<0.000000e+00> : vector<4x32xf32>
    %15 = tpu.matmul %13, %14, %cst_7 {dimension_numbers = #tpu.dot_dimension_numbers<[1], [0], [0], [1], [0, 0, 1, 1], [], []>} : vector<4x32xf32>, vector<32x32xf32>, vector<4x32xf32> -> vector<4x32xf32>
    %c168 = arith.constant 168 : index
    %c0_8 = arith.constant 0 : index
    %16 = vector.load %arg2[%c168, %c0_8] : memref<368x128xf32, #tpu.memory_space<vmem>>, vector<1x32xf32>
    %17 = vector.broadcast %16 : vector<1x32xf32> to vector<4x32xf32>
    %18 = arith.addf %15, %17 : vector<4x32xf32>
    %cst_9 = arith.constant 0.000000e+00 : f32
    %19 = vector.broadcast %cst_9 : f32 to vector<4x32xf32>
    %20 = arith.maximumf %18, %19 : vector<4x32xf32>
    %c176 = arith.constant 176 : index
    %c0_10 = arith.constant 0 : index
    %21 = vector.load %arg2[%c176, %c0_10] : memref<368x128xf32, #tpu.memory_space<vmem>>, vector<32x32xf32>
    %cst_11 = arith.constant dense<0.000000e+00> : vector<4x32xf32>
    %22 = tpu.matmul %20, %21, %cst_11 {dimension_numbers = #tpu.dot_dimension_numbers<[1], [0], [0], [1], [0, 0, 1, 1], [], []>} : vector<4x32xf32>, vector<32x32xf32>, vector<4x32xf32> -> vector<4x32xf32>
    %c208 = arith.constant 208 : index
    %c0_12 = arith.constant 0 : index
    %23 = vector.load %arg2[%c208, %c0_12] : memref<368x128xf32, #tpu.memory_space<vmem>>, vector<1x32xf32>
    %24 = vector.broadcast %23 : vector<1x32xf32> to vector<4x32xf32>
    %25 = arith.addf %22, %24 : vector<4x32xf32>
    %cst_13 = arith.constant 0.000000e+00 : f32
    %26 = vector.broadcast %cst_13 : f32 to vector<4x32xf32>
    %27 = arith.maximumf %25, %26 : vector<4x32xf32>
    %c0_14 = arith.constant 0 : index
    %c0_15 = arith.constant 0 : index
    %28 = vector.load %arg0[%c0_14, %c0_15] : memref<64x16xf32, #tpu.memory_space<vmem>>, vector<64x16xf32>
    %c0_16 = arith.constant 0 : index
    %c0_17 = arith.constant 0 : index
    %29 = vector.load %arg2[%c0_16, %c0_17] : memref<368x128xf32, #tpu.memory_space<vmem>>, vector<16x128xf32>
    %cst_18 = arith.constant dense<0.000000e+00> : vector<64x128xf32>
    %30 = tpu.matmul %28, %29, %cst_18 {dimension_numbers = #tpu.dot_dimension_numbers<[1], [0], [0], [1], [0, 0, 1, 1], [], []>} : vector<64x16xf32>, vector<16x128xf32>, vector<64x128xf32> -> vector<64x128xf32>
    %c48 = arith.constant 48 : index
    %c0_19 = arith.constant 0 : index
    %31 = vector.load %arg2[%c48, %c0_19] : memref<368x128xf32, #tpu.memory_space<vmem>>, vector<1x128xf32>
    %32 = vector.broadcast %31 : vector<1x128xf32> to vector<64x128xf32>
    %33 = arith.addf %30, %32 : vector<64x128xf32>
    %c16 = arith.constant 16 : index
    %c0_20 = arith.constant 0 : index
    %34 = vector.load %arg2[%c16, %c0_20] : memref<368x128xf32, #tpu.memory_space<vmem>>, vector<32x128xf32>
    %cst_21 = arith.constant 0.000000e+00 : f32
    %35 = vector.broadcast %cst_21 : f32 to vector<8x32xf32>
    %cst_22 = arith.constant 0.000000e+00 : f32
    %36 = vector.broadcast %cst_22 : f32 to vector<8x32xf32>
    %37 = vector.extract_strided_slice %33 {offsets = [0, 0], sizes = [8, 128], strides = [1, 1]} : vector<64x128xf32> to vector<8x128xf32>
    %cst_23 = arith.constant dense<0.000000e+00> : vector<8x128xf32>
    %38 = tpu.matmul %35, %34, %cst_23 {dimension_numbers = #tpu.dot_dimension_numbers<[1], [0], [0], [1], [0, 0, 1, 1], [], []>} : vector<8x32xf32>, vector<32x128xf32>, vector<8x128xf32> -> vector<8x128xf32>
    %39 = arith.addf %37, %38 : vector<8x128xf32>
    %40 = vector.extract_strided_slice %39 {offsets = [0, 0], sizes = [8, 32], strides = [1, 1]} : vector<8x128xf32> to vector<8x32xf32>
    %41 = arith.negf %40 : vector<8x32xf32>
    %42 = math.exp %41 : vector<8x32xf32>
    %cst_24 = arith.constant 1.000000e+00 : f32
    %43 = vector.broadcast %cst_24 : f32 to vector<8x32xf32>
    %44 = arith.addf %43, %42 : vector<8x32xf32>
    %45 = arith.divf %43, %44 : vector<8x32xf32>
    %46 = vector.extract_strided_slice %39 {offsets = [0, 32], sizes = [8, 32], strides = [1, 1]} : vector<8x128xf32> to vector<8x32xf32>
    %47 = arith.negf %46 : vector<8x32xf32>
    %48 = math.exp %47 : vector<8x32xf32>
    %cst_25 = arith.constant 1.000000e+00 : f32
    %49 = vector.broadcast %cst_25 : f32 to vector<8x32xf32>
    %50 = arith.addf %49, %48 : vector<8x32xf32>
    %51 = arith.divf %49, %50 : vector<8x32xf32>
    %52 = vector.extract_strided_slice %39 {offsets = [0, 64], sizes = [8, 32], strides = [1, 1]} : vector<8x128xf32> to vector<8x32xf32>
    %53 = math.tanh %52 : vector<8x32xf32>
    %54 = vector.extract_strided_slice %39 {offsets = [0, 96], sizes = [8, 32], strides = [1, 1]} : vector<8x128xf32> to vector<8x32xf32>
    %55 = arith.negf %54 : vector<8x32xf32>
    %56 = math.exp %55 : vector<8x32xf32>
    %cst_26 = arith.constant 1.000000e+00 : f32
    %57 = vector.broadcast %cst_26 : f32 to vector<8x32xf32>
    %58 = arith.addf %57, %56 : vector<8x32xf32>
    %59 = arith.divf %57, %58 : vector<8x32xf32>
    %60 = arith.mulf %51, %36 : vector<8x32xf32>
    %61 = arith.mulf %45, %53 : vector<8x32xf32>
    %62 = arith.addf %60, %61 : vector<8x32xf32>
    %63 = math.tanh %62 : vector<8x32xf32>
    %64 = arith.mulf %59, %63 : vector<8x32xf32>
    %65 = vector.extract_strided_slice %33 {offsets = [8, 0], sizes = [8, 128], strides = [1, 1]} : vector<64x128xf32> to vector<8x128xf32>
    %cst_27 = arith.constant dense<0.000000e+00> : vector<8x128xf32>
    %66 = tpu.matmul %64, %34, %cst_27 {dimension_numbers = #tpu.dot_dimension_numbers<[1], [0], [0], [1], [0, 0, 1, 1], [], []>} : vector<8x32xf32>, vector<32x128xf32>, vector<8x128xf32> -> vector<8x128xf32>
    %67 = arith.addf %65, %66 : vector<8x128xf32>
    %68 = vector.extract_strided_slice %67 {offsets = [0, 0], sizes = [8, 32], strides = [1, 1]} : vector<8x128xf32> to vector<8x32xf32>
    %69 = arith.negf %68 : vector<8x32xf32>
    %70 = math.exp %69 : vector<8x32xf32>
    %cst_28 = arith.constant 1.000000e+00 : f32
    %71 = vector.broadcast %cst_28 : f32 to vector<8x32xf32>
    %72 = arith.addf %71, %70 : vector<8x32xf32>
    %73 = arith.divf %71, %72 : vector<8x32xf32>
    %74 = vector.extract_strided_slice %67 {offsets = [0, 32], sizes = [8, 32], strides = [1, 1]} : vector<8x128xf32> to vector<8x32xf32>
    %75 = arith.negf %74 : vector<8x32xf32>
    %76 = math.exp %75 : vector<8x32xf32>
    %cst_29 = arith.constant 1.000000e+00 : f32
    %77 = vector.broadcast %cst_29 : f32 to vector<8x32xf32>
    %78 = arith.addf %77, %76 : vector<8x32xf32>
    %79 = arith.divf %77, %78 : vector<8x32xf32>
    %80 = vector.extract_strided_slice %67 {offsets = [0, 64], sizes = [8, 32], strides = [1, 1]} : vector<8x128xf32> to vector<8x32xf32>
    %81 = math.tanh %80 : vector<8x32xf32>
    %82 = vector.extract_strided_slice %67 {offsets = [0, 96], sizes = [8, 32], strides = [1, 1]} : vector<8x128xf32> to vector<8x32xf32>
    %83 = arith.negf %82 : vector<8x32xf32>
    %84 = math.exp %83 : vector<8x32xf32>
    %cst_30 = arith.constant 1.000000e+00 : f32
    %85 = vector.broadcast %cst_30 : f32 to vector<8x32xf32>
    %86 = arith.addf %85, %84 : vector<8x32xf32>
    %87 = arith.divf %85, %86 : vector<8x32xf32>
    %88 = arith.mulf %79, %62 : vector<8x32xf32>
    %89 = arith.mulf %73, %81 : vector<8x32xf32>
    %90 = arith.addf %88, %89 : vector<8x32xf32>
    %91 = math.tanh %90 : vector<8x32xf32>
    %92 = arith.mulf %87, %91 : vector<8x32xf32>
    %93 = vector.extract_strided_slice %33 {offsets = [16, 0], sizes = [8, 128], strides = [1, 1]} : vector<64x128xf32> to vector<8x128xf32>
    %cst_31 = arith.constant dense<0.000000e+00> : vector<8x128xf32>
    %94 = tpu.matmul %92, %34, %cst_31 {dimension_numbers = #tpu.dot_dimension_numbers<[1], [0], [0], [1], [0, 0, 1, 1], [], []>} : vector<8x32xf32>, vector<32x128xf32>, vector<8x128xf32> -> vector<8x128xf32>
    %95 = arith.addf %93, %94 : vector<8x128xf32>
    %96 = vector.extract_strided_slice %95 {offsets = [0, 0], sizes = [8, 32], strides = [1, 1]} : vector<8x128xf32> to vector<8x32xf32>
    %97 = arith.negf %96 : vector<8x32xf32>
    %98 = math.exp %97 : vector<8x32xf32>
    %cst_32 = arith.constant 1.000000e+00 : f32
    %99 = vector.broadcast %cst_32 : f32 to vector<8x32xf32>
    %100 = arith.addf %99, %98 : vector<8x32xf32>
    %101 = arith.divf %99, %100 : vector<8x32xf32>
    %102 = vector.extract_strided_slice %95 {offsets = [0, 32], sizes = [8, 32], strides = [1, 1]} : vector<8x128xf32> to vector<8x32xf32>
    %103 = arith.negf %102 : vector<8x32xf32>
    %104 = math.exp %103 : vector<8x32xf32>
    %cst_33 = arith.constant 1.000000e+00 : f32
    %105 = vector.broadcast %cst_33 : f32 to vector<8x32xf32>
    %106 = arith.addf %105, %104 : vector<8x32xf32>
    %107 = arith.divf %105, %106 : vector<8x32xf32>
    %108 = vector.extract_strided_slice %95 {offsets = [0, 64], sizes = [8, 32], strides = [1, 1]} : vector<8x128xf32> to vector<8x32xf32>
    %109 = math.tanh %108 : vector<8x32xf32>
    %110 = vector.extract_strided_slice %95 {offsets = [0, 96], sizes = [8, 32], strides = [1, 1]} : vector<8x128xf32> to vector<8x32xf32>
    %111 = arith.negf %110 : vector<8x32xf32>
    %112 = math.exp %111 : vector<8x32xf32>
    %cst_34 = arith.constant 1.000000e+00 : f32
    %113 = vector.broadcast %cst_34 : f32 to vector<8x32xf32>
    %114 = arith.addf %113, %112 : vector<8x32xf32>
    %115 = arith.divf %113, %114 : vector<8x32xf32>
    %116 = arith.mulf %107, %90 : vector<8x32xf32>
    %117 = arith.mulf %101, %109 : vector<8x32xf32>
    %118 = arith.addf %116, %117 : vector<8x32xf32>
    %119 = math.tanh %118 : vector<8x32xf32>
    %120 = arith.mulf %115, %119 : vector<8x32xf32>
    %121 = vector.extract_strided_slice %33 {offsets = [24, 0], sizes = [8, 128], strides = [1, 1]} : vector<64x128xf32> to vector<8x128xf32>
    %cst_35 = arith.constant dense<0.000000e+00> : vector<8x128xf32>
    %122 = tpu.matmul %120, %34, %cst_35 {dimension_numbers = #tpu.dot_dimension_numbers<[1], [0], [0], [1], [0, 0, 1, 1], [], []>} : vector<8x32xf32>, vector<32x128xf32>, vector<8x128xf32> -> vector<8x128xf32>
    %123 = arith.addf %121, %122 : vector<8x128xf32>
    %124 = vector.extract_strided_slice %123 {offsets = [0, 0], sizes = [8, 32], strides = [1, 1]} : vector<8x128xf32> to vector<8x32xf32>
    %125 = arith.negf %124 : vector<8x32xf32>
    %126 = math.exp %125 : vector<8x32xf32>
    %cst_36 = arith.constant 1.000000e+00 : f32
    %127 = vector.broadcast %cst_36 : f32 to vector<8x32xf32>
    %128 = arith.addf %127, %126 : vector<8x32xf32>
    %129 = arith.divf %127, %128 : vector<8x32xf32>
    %130 = vector.extract_strided_slice %123 {offsets = [0, 32], sizes = [8, 32], strides = [1, 1]} : vector<8x128xf32> to vector<8x32xf32>
    %131 = arith.negf %130 : vector<8x32xf32>
    %132 = math.exp %131 : vector<8x32xf32>
    %cst_37 = arith.constant 1.000000e+00 : f32
    %133 = vector.broadcast %cst_37 : f32 to vector<8x32xf32>
    %134 = arith.addf %133, %132 : vector<8x32xf32>
    %135 = arith.divf %133, %134 : vector<8x32xf32>
    %136 = vector.extract_strided_slice %123 {offsets = [0, 64], sizes = [8, 32], strides = [1, 1]} : vector<8x128xf32> to vector<8x32xf32>
    %137 = math.tanh %136 : vector<8x32xf32>
    %138 = vector.extract_strided_slice %123 {offsets = [0, 96], sizes = [8, 32], strides = [1, 1]} : vector<8x128xf32> to vector<8x32xf32>
    %139 = arith.negf %138 : vector<8x32xf32>
    %140 = math.exp %139 : vector<8x32xf32>
    %cst_38 = arith.constant 1.000000e+00 : f32
    %141 = vector.broadcast %cst_38 : f32 to vector<8x32xf32>
    %142 = arith.addf %141, %140 : vector<8x32xf32>
    %143 = arith.divf %141, %142 : vector<8x32xf32>
    %144 = arith.mulf %135, %118 : vector<8x32xf32>
    %145 = arith.mulf %129, %137 : vector<8x32xf32>
    %146 = arith.addf %144, %145 : vector<8x32xf32>
    %147 = math.tanh %146 : vector<8x32xf32>
    %148 = arith.mulf %143, %147 : vector<8x32xf32>
    %149 = vector.extract_strided_slice %33 {offsets = [32, 0], sizes = [8, 128], strides = [1, 1]} : vector<64x128xf32> to vector<8x128xf32>
    %cst_39 = arith.constant dense<0.000000e+00> : vector<8x128xf32>
    %150 = tpu.matmul %148, %34, %cst_39 {dimension_numbers = #tpu.dot_dimension_numbers<[1], [0], [0], [1], [0, 0, 1, 1], [], []>} : vector<8x32xf32>, vector<32x128xf32>, vector<8x128xf32> -> vector<8x128xf32>
    %151 = arith.addf %149, %150 : vector<8x128xf32>
    %152 = vector.extract_strided_slice %151 {offsets = [0, 0], sizes = [8, 32], strides = [1, 1]} : vector<8x128xf32> to vector<8x32xf32>
    %153 = arith.negf %152 : vector<8x32xf32>
    %154 = math.exp %153 : vector<8x32xf32>
    %cst_40 = arith.constant 1.000000e+00 : f32
    %155 = vector.broadcast %cst_40 : f32 to vector<8x32xf32>
    %156 = arith.addf %155, %154 : vector<8x32xf32>
    %157 = arith.divf %155, %156 : vector<8x32xf32>
    %158 = vector.extract_strided_slice %151 {offsets = [0, 32], sizes = [8, 32], strides = [1, 1]} : vector<8x128xf32> to vector<8x32xf32>
    %159 = arith.negf %158 : vector<8x32xf32>
    %160 = math.exp %159 : vector<8x32xf32>
    %cst_41 = arith.constant 1.000000e+00 : f32
    %161 = vector.broadcast %cst_41 : f32 to vector<8x32xf32>
    %162 = arith.addf %161, %160 : vector<8x32xf32>
    %163 = arith.divf %161, %162 : vector<8x32xf32>
    %164 = vector.extract_strided_slice %151 {offsets = [0, 64], sizes = [8, 32], strides = [1, 1]} : vector<8x128xf32> to vector<8x32xf32>
    %165 = math.tanh %164 : vector<8x32xf32>
    %166 = vector.extract_strided_slice %151 {offsets = [0, 96], sizes = [8, 32], strides = [1, 1]} : vector<8x128xf32> to vector<8x32xf32>
    %167 = arith.negf %166 : vector<8x32xf32>
    %168 = math.exp %167 : vector<8x32xf32>
    %cst_42 = arith.constant 1.000000e+00 : f32
    %169 = vector.broadcast %cst_42 : f32 to vector<8x32xf32>
    %170 = arith.addf %169, %168 : vector<8x32xf32>
    %171 = arith.divf %169, %170 : vector<8x32xf32>
    %172 = arith.mulf %163, %146 : vector<8x32xf32>
    %173 = arith.mulf %157, %165 : vector<8x32xf32>
    %174 = arith.addf %172, %173 : vector<8x32xf32>
    %175 = math.tanh %174 : vector<8x32xf32>
    %176 = arith.mulf %171, %175 : vector<8x32xf32>
    %177 = vector.extract_strided_slice %33 {offsets = [40, 0], sizes = [8, 128], strides = [1, 1]} : vector<64x128xf32> to vector<8x128xf32>
    %cst_43 = arith.constant dense<0.000000e+00> : vector<8x128xf32>
    %178 = tpu.matmul %176, %34, %cst_43 {dimension_numbers = #tpu.dot_dimension_numbers<[1], [0], [0], [1], [0, 0, 1, 1], [], []>} : vector<8x32xf32>, vector<32x128xf32>, vector<8x128xf32> -> vector<8x128xf32>
    %179 = arith.addf %177, %178 : vector<8x128xf32>
    %180 = vector.extract_strided_slice %179 {offsets = [0, 0], sizes = [8, 32], strides = [1, 1]} : vector<8x128xf32> to vector<8x32xf32>
    %181 = arith.negf %180 : vector<8x32xf32>
    %182 = math.exp %181 : vector<8x32xf32>
    %cst_44 = arith.constant 1.000000e+00 : f32
    %183 = vector.broadcast %cst_44 : f32 to vector<8x32xf32>
    %184 = arith.addf %183, %182 : vector<8x32xf32>
    %185 = arith.divf %183, %184 : vector<8x32xf32>
    %186 = vector.extract_strided_slice %179 {offsets = [0, 32], sizes = [8, 32], strides = [1, 1]} : vector<8x128xf32> to vector<8x32xf32>
    %187 = arith.negf %186 : vector<8x32xf32>
    %188 = math.exp %187 : vector<8x32xf32>
    %cst_45 = arith.constant 1.000000e+00 : f32
    %189 = vector.broadcast %cst_45 : f32 to vector<8x32xf32>
    %190 = arith.addf %189, %188 : vector<8x32xf32>
    %191 = arith.divf %189, %190 : vector<8x32xf32>
    %192 = vector.extract_strided_slice %179 {offsets = [0, 64], sizes = [8, 32], strides = [1, 1]} : vector<8x128xf32> to vector<8x32xf32>
    %193 = math.tanh %192 : vector<8x32xf32>
    %194 = vector.extract_strided_slice %179 {offsets = [0, 96], sizes = [8, 32], strides = [1, 1]} : vector<8x128xf32> to vector<8x32xf32>
    %195 = arith.negf %194 : vector<8x32xf32>
    %196 = math.exp %195 : vector<8x32xf32>
    %cst_46 = arith.constant 1.000000e+00 : f32
    %197 = vector.broadcast %cst_46 : f32 to vector<8x32xf32>
    %198 = arith.addf %197, %196 : vector<8x32xf32>
    %199 = arith.divf %197, %198 : vector<8x32xf32>
    %200 = arith.mulf %191, %174 : vector<8x32xf32>
    %201 = arith.mulf %185, %193 : vector<8x32xf32>
    %202 = arith.addf %200, %201 : vector<8x32xf32>
    %203 = math.tanh %202 : vector<8x32xf32>
    %204 = arith.mulf %199, %203 : vector<8x32xf32>
    %205 = vector.extract_strided_slice %33 {offsets = [48, 0], sizes = [8, 128], strides = [1, 1]} : vector<64x128xf32> to vector<8x128xf32>
    %cst_47 = arith.constant dense<0.000000e+00> : vector<8x128xf32>
    %206 = tpu.matmul %204, %34, %cst_47 {dimension_numbers = #tpu.dot_dimension_numbers<[1], [0], [0], [1], [0, 0, 1, 1], [], []>} : vector<8x32xf32>, vector<32x128xf32>, vector<8x128xf32> -> vector<8x128xf32>
    %207 = arith.addf %205, %206 : vector<8x128xf32>
    %208 = vector.extract_strided_slice %207 {offsets = [0, 0], sizes = [8, 32], strides = [1, 1]} : vector<8x128xf32> to vector<8x32xf32>
    %209 = arith.negf %208 : vector<8x32xf32>
    %210 = math.exp %209 : vector<8x32xf32>
    %cst_48 = arith.constant 1.000000e+00 : f32
    %211 = vector.broadcast %cst_48 : f32 to vector<8x32xf32>
    %212 = arith.addf %211, %210 : vector<8x32xf32>
    %213 = arith.divf %211, %212 : vector<8x32xf32>
    %214 = vector.extract_strided_slice %207 {offsets = [0, 32], sizes = [8, 32], strides = [1, 1]} : vector<8x128xf32> to vector<8x32xf32>
    %215 = arith.negf %214 : vector<8x32xf32>
    %216 = math.exp %215 : vector<8x32xf32>
    %cst_49 = arith.constant 1.000000e+00 : f32
    %217 = vector.broadcast %cst_49 : f32 to vector<8x32xf32>
    %218 = arith.addf %217, %216 : vector<8x32xf32>
    %219 = arith.divf %217, %218 : vector<8x32xf32>
    %220 = vector.extract_strided_slice %207 {offsets = [0, 64], sizes = [8, 32], strides = [1, 1]} : vector<8x128xf32> to vector<8x32xf32>
    %221 = math.tanh %220 : vector<8x32xf32>
    %222 = vector.extract_strided_slice %207 {offsets = [0, 96], sizes = [8, 32], strides = [1, 1]} : vector<8x128xf32> to vector<8x32xf32>
    %223 = arith.negf %222 : vector<8x32xf32>
    %224 = math.exp %223 : vector<8x32xf32>
    %cst_50 = arith.constant 1.000000e+00 : f32
    %225 = vector.broadcast %cst_50 : f32 to vector<8x32xf32>
    %226 = arith.addf %225, %224 : vector<8x32xf32>
    %227 = arith.divf %225, %226 : vector<8x32xf32>
    %228 = arith.mulf %219, %202 : vector<8x32xf32>
    %229 = arith.mulf %213, %221 : vector<8x32xf32>
    %230 = arith.addf %228, %229 : vector<8x32xf32>
    %231 = math.tanh %230 : vector<8x32xf32>
    %232 = arith.mulf %227, %231 : vector<8x32xf32>
    %233 = vector.extract_strided_slice %33 {offsets = [56, 0], sizes = [8, 128], strides = [1, 1]} : vector<64x128xf32> to vector<8x128xf32>
    %cst_51 = arith.constant dense<0.000000e+00> : vector<8x128xf32>
    %234 = tpu.matmul %232, %34, %cst_51 {dimension_numbers = #tpu.dot_dimension_numbers<[1], [0], [0], [1], [0, 0, 1, 1], [], []>} : vector<8x32xf32>, vector<32x128xf32>, vector<8x128xf32> -> vector<8x128xf32>
    %235 = arith.addf %233, %234 : vector<8x128xf32>
    %236 = vector.extract_strided_slice %235 {offsets = [0, 0], sizes = [8, 32], strides = [1, 1]} : vector<8x128xf32> to vector<8x32xf32>
    %237 = arith.negf %236 : vector<8x32xf32>
    %238 = math.exp %237 : vector<8x32xf32>
    %cst_52 = arith.constant 1.000000e+00 : f32
    %239 = vector.broadcast %cst_52 : f32 to vector<8x32xf32>
    %240 = arith.addf %239, %238 : vector<8x32xf32>
    %241 = arith.divf %239, %240 : vector<8x32xf32>
    %242 = vector.extract_strided_slice %235 {offsets = [0, 32], sizes = [8, 32], strides = [1, 1]} : vector<8x128xf32> to vector<8x32xf32>
    %243 = arith.negf %242 : vector<8x32xf32>
    %244 = math.exp %243 : vector<8x32xf32>
    %cst_53 = arith.constant 1.000000e+00 : f32
    %245 = vector.broadcast %cst_53 : f32 to vector<8x32xf32>
    %246 = arith.addf %245, %244 : vector<8x32xf32>
    %247 = arith.divf %245, %246 : vector<8x32xf32>
    %248 = vector.extract_strided_slice %235 {offsets = [0, 64], sizes = [8, 32], strides = [1, 1]} : vector<8x128xf32> to vector<8x32xf32>
    %249 = math.tanh %248 : vector<8x32xf32>
    %250 = vector.extract_strided_slice %235 {offsets = [0, 96], sizes = [8, 32], strides = [1, 1]} : vector<8x128xf32> to vector<8x32xf32>
    %251 = arith.negf %250 : vector<8x32xf32>
    %252 = math.exp %251 : vector<8x32xf32>
    %cst_54 = arith.constant 1.000000e+00 : f32
    %253 = vector.broadcast %cst_54 : f32 to vector<8x32xf32>
    %254 = arith.addf %253, %252 : vector<8x32xf32>
    %255 = arith.divf %253, %254 : vector<8x32xf32>
    %256 = arith.mulf %247, %230 : vector<8x32xf32>
    %257 = arith.mulf %241, %249 : vector<8x32xf32>
    %258 = arith.addf %256, %257 : vector<8x32xf32>
    %259 = math.tanh %258 : vector<8x32xf32>
    %260 = arith.mulf %255, %259 : vector<8x32xf32>
    %261 = vector.extract_strided_slice %260 {offsets = [0, 0], sizes = [4, 32], strides = [1, 1]} : vector<8x32xf32> to vector<4x32xf32>
    %c56 = arith.constant 56 : index
    %c0_55 = arith.constant 0 : index
    %262 = vector.load %arg2[%c56, %c0_55] : memref<368x128xf32, #tpu.memory_space<vmem>>, vector<32x32xf32>
    %cst_56 = arith.constant dense<0.000000e+00> : vector<4x32xf32>
    %263 = tpu.matmul %261, %262, %cst_56 {dimension_numbers = #tpu.dot_dimension_numbers<[1], [0], [0], [1], [0, 0, 1, 1], [], []>} : vector<4x32xf32>, vector<32x32xf32>, vector<4x32xf32> -> vector<4x32xf32>
    %c88 = arith.constant 88 : index
    %c0_57 = arith.constant 0 : index
    %264 = vector.load %arg2[%c88, %c0_57] : memref<368x128xf32, #tpu.memory_space<vmem>>, vector<1x32xf32>
    %265 = vector.broadcast %264 : vector<1x32xf32> to vector<4x32xf32>
    %266 = arith.addf %263, %265 : vector<4x32xf32>
    %267 = tpu.concatenate %27, %266 in 1 : vector<4x32xf32>, vector<4x32xf32> -> vector<4x64xf32>
    %c216 = arith.constant 216 : index
    %c0_58 = arith.constant 0 : index
    %268 = vector.load %arg2[%c216, %c0_58] : memref<368x128xf32, #tpu.memory_space<vmem>>, vector<64x32xf32>
    %cst_59 = arith.constant dense<0.000000e+00> : vector<4x32xf32>
    %269 = tpu.matmul %267, %268, %cst_59 {dimension_numbers = #tpu.dot_dimension_numbers<[1], [0], [0], [1], [0, 0, 1, 1], [], []>} : vector<4x64xf32>, vector<64x32xf32>, vector<4x32xf32> -> vector<4x32xf32>
    %c280 = arith.constant 280 : index
    %c0_60 = arith.constant 0 : index
    %270 = vector.load %arg2[%c280, %c0_60] : memref<368x128xf32, #tpu.memory_space<vmem>>, vector<1x32xf32>
    %271 = vector.broadcast %270 : vector<1x32xf32> to vector<4x32xf32>
    %272 = arith.addf %269, %271 : vector<4x32xf32>
    %cst_61 = arith.constant 0.000000e+00 : f32
    %273 = vector.broadcast %cst_61 : f32 to vector<4x32xf32>
    %274 = arith.maximumf %272, %273 : vector<4x32xf32>
    %c288 = arith.constant 288 : index
    %c0_62 = arith.constant 0 : index
    %275 = vector.load %arg2[%c288, %c0_62] : memref<368x128xf32, #tpu.memory_space<vmem>>, vector<32x32xf32>
    %cst_63 = arith.constant dense<0.000000e+00> : vector<4x32xf32>
    %276 = tpu.matmul %274, %275, %cst_63 {dimension_numbers = #tpu.dot_dimension_numbers<[1], [0], [0], [1], [0, 0, 1, 1], [], []>} : vector<4x32xf32>, vector<32x32xf32>, vector<4x32xf32> -> vector<4x32xf32>
    %c320 = arith.constant 320 : index
    %c0_64 = arith.constant 0 : index
    %277 = vector.load %arg2[%c320, %c0_64] : memref<368x128xf32, #tpu.memory_space<vmem>>, vector<1x32xf32>
    %278 = vector.broadcast %277 : vector<1x32xf32> to vector<4x32xf32>
    %279 = arith.addf %276, %278 : vector<4x32xf32>
    %cst_65 = arith.constant 0.000000e+00 : f32
    %280 = vector.broadcast %cst_65 : f32 to vector<4x32xf32>
    %281 = arith.maximumf %279, %280 : vector<4x32xf32>
    %c328 = arith.constant 328 : index
    %c0_66 = arith.constant 0 : index
    %282 = vector.load %arg2[%c328, %c0_66] : memref<368x128xf32, #tpu.memory_space<vmem>>, vector<32x64xf32>
    %cst_67 = arith.constant dense<0.000000e+00> : vector<4x64xf32>
    %283 = tpu.matmul %281, %282, %cst_67 {dimension_numbers = #tpu.dot_dimension_numbers<[1], [0], [0], [1], [0, 0, 1, 1], [], []>} : vector<4x32xf32>, vector<32x64xf32>, vector<4x64xf32> -> vector<4x64xf32>
    %c360 = arith.constant 360 : index
    %c0_68 = arith.constant 0 : index
    %284 = vector.load %arg2[%c360, %c0_68] : memref<368x128xf32, #tpu.memory_space<vmem>>, vector<1x64xf32>
    %285 = vector.broadcast %284 : vector<1x64xf32> to vector<4x64xf32>
    %286 = arith.addf %283, %285 : vector<4x64xf32>
    %287 = tpu.concatenate %267, %286 in 1 : vector<4x64xf32>, vector<4x64xf32> -> vector<4x128xf32>
    %c0_69 = arith.constant 0 : index
    %c0_70 = arith.constant 0 : index
    %288 = vector.load %arg3[%c0_69, %c0_70] : memref<4x128xf32, #tpu.memory_space<vmem>>, vector<4x128xf32>
    tpu.vector_store %arg3[%c0_69, %c0_70], %287 {strides = array<i32>} : memref<4x128xf32, #tpu.memory_space<vmem>>, vector<4x128xf32>,
    return
  }
}

</mosaic_0001>

<llo_original>
// kernel: forward.1
$region0: #{forward.1}
  #allocation0 [shape = 'u32[]', space=smem, size = 0x4, offset = 0x4, fixed_abs, tag = 'smem constant byte address 0x4 - core index']
  #allocation1 [shape = 'u32[144,128]{1,0:T(1,128)}', space=vmem, size = 0x12000, scoped, tag = 'internal scratch']
  %s0 = inlined_call_operand.vmem [shape: f32[64,16], index: 0, kind: input, shape index: {}]
  %s1 = inlined_call_operand.vmem [shape: f32[4,16], index: 1, kind: input, shape index: {}]
  %s2 = inlined_call_operand.hbm [shape: f32[368,128], index: 2, kind: input, shape index: {}]
  %s3 = inlined_call_operand.vmem [shape: f32[4,128], index: 3, kind: output, shape index: {}]
  %s4 = sld [smem:[#allocation0]]
  $region26: #{forward.1} parent=0
    _
  %s6 = ssub.s32 1, %s4
  %s7 = scalar_select 0, %s6, %s4
  $region1: #{forward.1} parent=0
    #allocation2 [shape = 'u8[188416]{0}', space=vmem, size = 0x2e000, scoped, tag = 'input window, operand 2, single buffered']
    #allocation3 [shape = 's32[1]{0}', space=sflag, size = 0x4, scoped, tag = 'scoped memory for forward.1']
    %8 = vsyncpa [#allocation3], 0
    // Predicated region
    $region2: #{forward.1} parent=1 // pred_check
      _
    $region3: #{forward.1} parent=1 // pred_check_branch
      %10 = sbr.rel (0) target = $region5
    $region4: #{forward.1} parent=1 // pred_region
      _
    $region5: #{forward.1} parent=1 // pred_fallthru
      _
    // Predicated region
    $region6: #{forward.1} parent=1 // pred_check
      _
    $region7: #{forward.1} parent=1 // pred_check_branch
      %12 = sbr.rel (0) target = $region9
    $region8: #{forward.1} parent=1 // pred_region
      _
    $region9: #{forward.1} parent=1 // pred_fallthru
      _
    // Predicated region
    $region10: #{forward.1} parent=1 // pred_check
      _
    $region11: #{forward.1} parent=1 // pred_check_branch
      %14 = sbr.rel (0) target = $region13
    $region12: #{forward.1} parent=1 // pred_region
      %s16 = ssub.s32 5888, 5888
      %17 = vsyncadd [#allocation3], %s16
      %s18 = sshll.u32 [#allocation2], 4
      %s19 = int_to_ptr.vmem [resolvable:$true] %s18
      %24 = dma.hbm_to_vmem [thread:$0]  %s2, 5888, %s19, [#allocation3], 128, 128, 8
    $region13: #{forward.1} parent=1 // pred_fallthru
      _
    // Predicated region
    $region14: #{forward.1} parent=1 // pred_check
      _
    $region15: #{forward.1} parent=1 // pred_check_branch
      %26 = sbr.rel (0) target = $region17
    $region16: #{forward.1} parent=1 // pred_region
      %27 = dma.done [#allocation3], 5888
    $region17: #{forward.1} parent=1 // pred_fallthru
      _
    %v28 = vld [vmem:[%s1] sm:$0xf]
    %v29 = vld [vmem:[#allocation2 + $0x60] sm:$0x1]
    %v30 = vlaneseq
    %v31 = vshrl.u32 %v30, 7
    %v32 = vsub.s32 0, %v31
    %v33 = vrot.slane %v29, %v32
    %v34 = vmul.f32 %v28, %v33
    %v35 = vld [vmem:[#allocation2 + $0x68] sm:$0x1]
    %v36 = vlaneseq
    %v37 = vshrl.u32 %v36, 7
    %v38 = vsub.s32 0, %v37
    %v39 = vrot.slane %v35, %v38
    %v40 = vadd.f32 %v34, %v39
    %v41 = vld [vmem:[#allocation2 + $0x70] sm:$0xff]
    %v42 = vld [vmem:[#allocation2 + $0x78] sm:$0xff]
    %v43 = vld [vmem:[#allocation2 + $0x80] sm:$0x1]
    %v44 = vlaneseq
    %v45 = vshrl.u32 %v44, 7
    %v46 = vsub.s32 0, %v45
    %v47 = vrot.slane %v43, %v46
    %vm48 = vcmask 130048
    %v50 = vsel %vm48, %v40, 0
    %52 = vmatprep.subr.mxu0 0.0
    %53 = vmatpush1.msra.mxu0 %v41
    %54 = vmatprep.subr.mxu0 0.0
    %55 = vmatpush1.msra.mxu0 %v42
    %56 = vmatprep.subr.mxu0 0.0
    %57 = vmatpush1.msra.mxu0 0.0
    %58 = vmatprep.subr.mxu0 0.0
    %59 = vmatpush1.msra.mxu0 0.0
    %60 = vmatprep.subr.mxu0 0.0
    %61 = vmatpush1.msra.mxu0 0.0
    %62 = vmatprep.subr.mxu0 0.0
    %63 = vmatpush1.msra.mxu0 0.0
    %64 = vmatprep.subr.mxu0 0.0
    %65 = vmatpush1.msra.mxu0 0.0
    %66 = vmatprep.subr.mxu0 0.0
    %67 = vmatpush1.msra.mxu0 0.0
    %68 = vmatprep.subr.mxu0 0.0
    %69 = vmatpush1.msra.mxu0 0.0
    %70 = vmatprep.subr.mxu0 0.0
    %71 = vmatpush1.msra.mxu0 0.0
    %72 = vmatprep.subr.mxu0 0.0
    %73 = vmatpush1.msra.mxu0 0.0
    %74 = vmatprep.subr.mxu0 0.0
    %75 = vmatpush1.msra.mxu0 0.0
    %76 = vmatprep.subr.mxu0 0.0
    %77 = vmatpush1.msra.mxu0 0.0
    %78 = vmatprep.subr.mxu0 0.0
    %79 = vmatpush1.msra.mxu0 0.0
    %80 = vmatprep.subr.mxu0 0.0
    %81 = vmatpush1.msra.mxu0 0.0
    %82 = vmatprep.subr.mxu0 0.0
    %83 = vmatpush1.msra.mxu0 0.0
    %84 = vmatprep.subr.mxu0 0.0
    %85 = vmatpush1.msra.mxu0 0.0
    %86 = vmatprep.subr.mxu0 0.0
    %87 = vmatpush1.msra.mxu0 0.0
    %88 = vmatprep.subr.mxu0 0.0
    %89 = vmatpush1.msra.mxu0 0.0
    %90 = vmatprep.subr.mxu0 0.0
    %91 = vmatpush1.msra.mxu0 0.0
    %92 = vmatprep.subr.mxu0 0.0
    %93 = vmatpush1.msra.mxu0 0.0
    %94 = vmatprep.subr.mxu0 0.0
    %95 = vmatpush1.msra.mxu0 0.0
    %96 = vmatprep.subr.mxu0 0.0
    %97 = vmatpush1.msra.mxu0 0.0
    %98 = vmatprep.subr.mxu0 0.0
    %99 = vmatpush1.msra.mxu0 0.0
    %100 = vmatprep.subr.mxu0 0.0
    %101 = vmatpush1.msra.mxu0 0.0
    %102 = vmatprep.subr.mxu0 0.0
    %103 = vmatpush1.msra.mxu0 0.0
    %104 = vmatprep.subr.mxu0 0.0
    %105 = vmatpush1.msra.mxu0 0.0
    %106 = vmatprep.subr.mxu0 0.0
    %107 = vmatpush1.msra.mxu0 0.0
    %108 = vmatprep.subr.mxu0 0.0
    %109 = vmatpush1.msra.mxu0 0.0
    %110 = vmatprep.subr.mxu0 0.0
    %111 = vmatpush1.msra.mxu0 0.0
    %112 = vmatprep.subr.mxu0 0.0
    %113 = vmatpush1.msra.mxu0 0.0
    %114 = vmatprep.subr.mxu0 0.0
    %115 = vmatpush1.msra.mxu0 0.0
    %116 = vmatprep.mubr.f32.mxu0 0.0
    %117 = vmatmul.mubr.f32.gmra.mrb[0].mxu0 %v50
    %v118 = vpop.f32.mrb[0].mxu0
    %v119 = vadd.f32 %v47, %v118
    %v120 = vpop.f32.mrb[0].mxu0
    %121 = vdwg.mxu0
    %v122 = vmax.f32 %v119, 0.0
    %v123 = vld [vmem:[#allocation2 + $0x88] sm:$0xff]
    %v124 = vld [vmem:[#allocation2 + $0x90] sm:$0xff]
    %v125 = vld [vmem:[#allocation2 + $0x98] sm:$0xff]
    %v126 = vld [vmem:[#allocation2 + $0xa0] sm:$0xff]
    %v127 = vld [vmem:[#allocation2 + $0xa8] sm:$0x1]
    %v128 = vlaneseq
    %v129 = vshrl.u32 %v128, 7
    %v130 = vsub.s32 0, %v129
    %v131 = vrot.slane %v127, %v130
    %vm132 = vcmask 261120
    %v134 = vsel %vm132, %v122, 0
    %136 = vmatprep.subr.mxu0 0.0
    %137 = vmatpush1.msra.mxu0 %v123
    %138 = vmatprep.subr.mxu0 0.0
    %139 = vmatpush1.msra.mxu0 %v124
    %140 = vmatprep.subr.mxu0 0.0
    %141 = vmatpush1.msra.mxu0 %v125
    %142 = vmatprep.subr.mxu0 0.0
    %143 = vmatpush1.msra.mxu0 %v126
    %144 = vmatprep.subr.mxu0 0.0
    %145 = vmatpush1.msra.mxu0 0.0
    %146 = vmatprep.subr.mxu0 0.0
    %147 = vmatpush1.msra.mxu0 0.0
    %148 = vmatprep.subr.mxu0 0.0
    %149 = vmatpush1.msra.mxu0 0.0
    %150 = vmatprep.subr.mxu0 0.0
    %151 = vmatpush1.msra.mxu0 0.0
    %152 = vmatprep.subr.mxu0 0.0
    %153 = vmatpush1.msra.mxu0 0.0
    %154 = vmatprep.subr.mxu0 0.0
    %155 = vmatpush1.msra.mxu0 0.0
    %156 = vmatprep.subr.mxu0 0.0
    %157 = vmatpush1.msra.mxu0 0.0
    %158 = vmatprep.subr.mxu0 0.0
    %159 = vmatpush1.msra.mxu0 0.0
    %160 = vmatprep.subr.mxu0 0.0
    %161 = vmatpush1.msra.mxu0 0.0
    %162 = vmatprep.subr.mxu0 0.0
    %163 = vmatpush1.msra.mxu0 0.0
    %164 = vmatprep.subr.mxu0 0.0
    %165 = vmatpush1.msra.mxu0 0.0
    %166 = vmatprep.subr.mxu0 0.0
    %167 = vmatpush1.msra.mxu0 0.0
    %168 = vmatprep.subr.mxu0 0.0
    %169 = vmatpush1.msra.mxu0 0.0
    %170 = vmatprep.subr.mxu0 0.0
    %171 = vmatpush1.msra.mxu0 0.0
    %172 = vmatprep.subr.mxu0 0.0
    %173 = vmatpush1.msra.mxu0 0.0
    %174 = vmatprep.subr.mxu0 0.0
    %175 = vmatpush1.msra.mxu0 0.0
    %176 = vmatprep.subr.mxu0 0.0
    %177 = vmatpush1.msra.mxu0 0.0
    %178 = vmatprep.subr.mxu0 0.0
    %179 = vmatpush1.msra.mxu0 0.0
    %180 = vmatprep.subr.mxu0 0.0
    %181 = vmatpush1.msra.mxu0 0.0
    %182 = vmatprep.subr.mxu0 0.0
    %183 = vmatpush1.msra.mxu0 0.0
    %184 = vmatprep.subr.mxu0 0.0
    %185 = vmatpush1.msra.mxu0 0.0
    %186 = vmatprep.subr.mxu0 0.0
    %187 = vmatpush1.msra.mxu0 0.0
    %188 = vmatprep.subr.mxu0 0.0
    %189 = vmatpush1.msra.mxu0 0.0
    %190 = vmatprep.subr.mxu0 0.0
    %191 = vmatpush1.msra.mxu0 0.0
    %192 = vmatprep.subr.mxu0 0.0
    %193 = vmatpush1.msra.mxu0 0.0
    %194 = vmatprep.subr.mxu0 0.0
    %195 = vmatpush1.msra.mxu0 0.0
    %196 = vmatprep.subr.mxu0 0.0
    %197 = vmatpush1.msra.mxu0 0.0
    %198 = vmatprep.subr.mxu0 0.0
    %199 = vmatpush1.msra.mxu0 0.0
    %200 = vmatprep.mubr.f32.mxu0 0.0
    %201 = vmatmul.mubr.f32.gmra.mrb[0].mxu0 %v134
    %v202 = vpop.f32.mrb[0].mxu0
    %v203 = vadd.f32 %v131, %v202
    %v204 = vpop.f32.mrb[0].mxu0
    %205 = vdwg.mxu0
    %v206 = vmax.f32 %v203, 0.0
    %v207 = vld [vmem:[#allocation2 + $0xb0] sm:$0xff]
    %v208 = vld [vmem:[#allocation2 + $0xb8] sm:$0xff]
    %v209 = vld [vmem:[#allocation2 + $0xc0] sm:$0xff]
    %v210 = vld [vmem:[#allocation2 + $0xc8] sm:$0xff]
    %v211 = vld [vmem:[#allocation2 + $0xd0] sm:$0x1]
    %v212 = vlaneseq
    %v213 = vshrl.u32 %v212, 7
    %v214 = vsub.s32 0, %v213
    %v215 = vrot.slane %v211, %v214
    %v217 = vsel %vm132, %v206, 0
    %219 = vmatprep.subr.mxu0 0.0
    %220 = vmatpush1.msra.mxu0 %v207
    %221 = vmatprep.subr.mxu0 0.0
    %222 = vmatpush1.msra.mxu0 %v208
    %223 = vmatprep.subr.mxu0 0.0
    %224 = vmatpush1.msra.mxu0 %v209
    %225 = vmatprep.subr.mxu0 0.0
    %226 = vmatpush1.msra.mxu0 %v210
    %227 = vmatprep.subr.mxu0 0.0
    %228 = vmatpush1.msra.mxu0 0.0
    %229 = vmatprep.subr.mxu0 0.0
    %230 = vmatpush1.msra.mxu0 0.0
    %231 = vmatprep.subr.mxu0 0.0
    %232 = vmatpush1.msra.mxu0 0.0
    %233 = vmatprep.subr.mxu0 0.0
    %234 = vmatpush1.msra.mxu0 0.0
    %235 = vmatprep.subr.mxu0 0.0
    %236 = vmatpush1.msra.mxu0 0.0
    %237 = vmatprep.subr.mxu0 0.0
    %238 = vmatpush1.msra.mxu0 0.0
    %239 = vmatprep.subr.mxu0 0.0
    %240 = vmatpush1.msra.mxu0 0.0
    %241 = vmatprep.subr.mxu0 0.0
    %242 = vmatpush1.msra.mxu0 0.0
    %243 = vmatprep.subr.mxu0 0.0
    %244 = vmatpush1.msra.mxu0 0.0
    %245 = vmatprep.subr.mxu0 0.0
    %246 = vmatpush1.msra.mxu0 0.0
    %247 = vmatprep.subr.mxu0 0.0
    %248 = vmatpush1.msra.mxu0 0.0
    %249 = vmatprep.subr.mxu0 0.0
    %250 = vmatpush1.msra.mxu0 0.0
    %251 = vmatprep.subr.mxu0 0.0
    %252 = vmatpush1.msra.mxu0 0.0
    %253 = vmatprep.subr.mxu0 0.0
    %254 = vmatpush1.msra.mxu0 0.0
    %255 = vmatprep.subr.mxu0 0.0
    %256 = vmatpush1.msra.mxu0 0.0
    %257 = vmatprep.subr.mxu0 0.0
    %258 = vmatpush1.msra.mxu0 0.0
    %259 = vmatprep.subr.mxu0 0.0
    %260 = vmatpush1.msra.mxu0 0.0
    %261 = vmatprep.subr.mxu0 0.0
    %262 = vmatpush1.msra.mxu0 0.0
    %263 = vmatprep.subr.mxu0 0.0
    %264 = vmatpush1.msra.mxu0 0.0
    %265 = vmatprep.subr.mxu0 0.0
    %266 = vmatpush1.msra.mxu0 0.0
    %267 = vmatprep.subr.mxu0 0.0
    %268 = vmatpush1.msra.mxu0 0.0
    %269 = vmatprep.subr.mxu0 0.0
    %270 = vmatpush1.msra.mxu0 0.0
    %271 = vmatprep.subr.mxu0 0.0
    %272 = vmatpush1.msra.mxu0 0.0
    %273 = vmatprep.subr.mxu0 0.0
    %274 = vmatpush1.msra.mxu0 0.0
    %275 = vmatprep.subr.mxu0 0.0
    %276 = vmatpush1.msra.mxu0 0.0
    %277 = vmatprep.subr.mxu0 0.0
    %278 = vmatpush1.msra.mxu0 0.0
    %279 = vmatprep.subr.mxu0 0.0
    %280 = vmatpush1.msra.mxu0 0.0
    %281 = vmatprep.subr.mxu0 0.0
    %282 = vmatpush1.msra.mxu0 0.0
    %283 = vmatprep.mubr.f32.mxu0 0.0
    %284 = vmatmul.mubr.f32.gmra.mrb[0].mxu0 %v217
    %v285 = vpop.f32.mrb[0].mxu0
    %v286 = vadd.f32 %v215, %v285
    %v287 = vpop.f32.mrb[0].mxu0
    %288 = vdwg.mxu0
    %v289 = vmax.f32 %v286, 0.0
    %v290 = vld [vmem:[%s0] sm:$0xff]
    %v291 = vld [vmem:[%s0 + $0x8] sm:$0xff]
    %v292 = vld [vmem:[%s0 + $0x10] sm:$0xff]
    %v293 = vld [vmem:[%s0 + $0x18] sm:$0xff]
    %v294 = vld [vmem:[%s0 + $0x20] sm:$0xff]
    %v295 = vld [vmem:[%s0 + $0x28] sm:$0xff]
    %v296 = vld [vmem:[%s0 + $0x30] sm:$0xff]
    %v297 = vld [vmem:[%s0 + $0x38] sm:$0xff]
    %v298 = vld [vmem:[#allocation2] sm:$0xff]
    %v299 = vld [vmem:[#allocation2 + $0x8] sm:$0xff]
    %v300 = vld [vmem:[#allocation2 + $0x30] sm:$0x1]
    %v301 = vlaneseq
    %v302 = vshrl.u32 %v301, 7
    %v303 = vsub.s32 0, %v302
    %v304 = vrot.slane %v300, %v303
    %v306 = vsel %vm48, %v290, 0
    %v309 = vsel %vm48, %v291, 0
    %v312 = vsel %vm48, %v292, 0
    %v315 = vsel %vm48, %v293, 0
    %v318 = vsel %vm48, %v294, 0
    %v321 = vsel %vm48, %v295, 0
    %v324 = vsel %vm48, %v296, 0
    %v327 = vsel %vm48, %v297, 0
    %329 = vmatprep.subr.mxu0 0.0
    %330 = vmatpush1.msra.mxu0 %v298
    %331 = vmatprep.subr.mxu0 0.0
    %332 = vmatpush1.msra.mxu0 %v299
    %333 = vmatprep.subr.mxu0 0.0
    %334 = vmatpush1.msra.mxu0 0.0
    %335 = vmatprep.subr.mxu0 0.0
    %336 = vmatpush1.msra.mxu0 0.0
    %337 = vmatprep.subr.mxu0 0.0
    %338 = vmatpush1.msra.mxu0 0.0
    %339 = vmatprep.subr.mxu0 0.0
    %340 = vmatpush1.msra.mxu0 0.0
    %341 = vmatprep.subr.mxu0 0.0
    %342 = vmatpush1.msra.mxu0 0.0
    %343 = vmatprep.subr.mxu0 0.0
    %344 = vmatpush1.msra.mxu0 0.0
    %345 = vmatprep.subr.mxu0 0.0
    %346 = vmatpush1.msra.mxu0 0.0
    %347 = vmatprep.subr.mxu0 0.0
    %348 = vmatpush1.msra.mxu0 0.0
    %349 = vmatprep.subr.mxu0 0.0
    %350 = vmatpush1.msra.mxu0 0.0
    %351 = vmatprep.subr.mxu0 0.0
    %352 = vmatpush1.msra.mxu0 0.0
    %353 = vmatprep.subr.mxu0 0.0
    %354 = vmatpush1.msra.mxu0 0.0
    %355 = vmatprep.subr.mxu0 0.0
    %356 = vmatpush1.msra.mxu0 0.0
    %357 = vmatprep.subr.mxu0 0.0
    %358 = vmatpush1.msra.mxu0 0.0
    %359 = vmatprep.subr.mxu0 0.0
    %360 = vmatpush1.msra.mxu0 0.0
    %361 = vmatprep.subr.mxu0 0.0
    %362 = vmatpush1.msra.mxu0 0.0
    %363 = vmatprep.subr.mxu0 0.0
    %364 = vmatpush1.msra.mxu0 0.0
    %365 = vmatprep.subr.mxu0 0.0
    %366 = vmatpush1.msra.mxu0 0.0
    %367 = vmatprep.subr.mxu0 0.0
    %368 = vmatpush1.msra.mxu0 0.0
    %369 = vmatprep.subr.mxu0 0.0
    %370 = vmatpush1.msra.mxu0 0.0
    %371 = vmatprep.subr.mxu0 0.0
    %372 = vmatpush1.msra.mxu0 0.0
    %373 = vmatprep.subr.mxu0 0.0
    %374 = vmatpush1.msra.mxu0 0.0
    %375 = vmatprep.subr.mxu0 0.0
    %376 = vmatpush1.msra.mxu0 0.0
    %377 = vmatprep.subr.mxu0 0.0
    %378 = vmatpush1.msra.mxu0 0.0
    %379 = vmatprep.subr.mxu0 0.0
    %380 = vmatpush1.msra.mxu0 0.0
    %381 = vmatprep.subr.mxu0 0.0
    %382 = vmatpush1.msra.mxu0 0.0
    %383 = vmatprep.subr.mxu0 0.0
    %384 = vmatpush1.msra.mxu0 0.0
    %385 = vmatprep.subr.mxu0 0.0
    %386 = vmatpush1.msra.mxu0 0.0
    %387 = vmatprep.subr.mxu0 0.0
    %388 = vmatpush1.msra.mxu0 0.0
    %389 = vmatprep.subr.mxu0 0.0
    %390 = vmatpush1.msra.mxu0 0.0
    %391 = vmatprep.subr.mxu0 0.0
    %392 = vmatpush1.msra.mxu0 0.0
    %393 = vmatprep.mubr.f32.mxu0 0.0
    %394 = vmatmul.mubr.f32.gmra.mrb[0].mxu0 %v306
    %v395 = vpop.f32.mrb[0].mxu0
    %v396 = vadd.f32 %v304, %v395
    %v397 = vpop.f32.mrb[0].mxu0
    %398 = vmatprep.mubr.f32.mxu0 0.0
    %399 = vmatmul.mubr.f32.gmra.mrb[0].mxu0 %v309
    %v400 = vpop.f32.mrb[0].mxu0
    %v401 = vadd.f32 %v304, %v400
    %v402 = vpop.f32.mrb[0].mxu0
    %403 = vmatprep.mubr.f32.mxu0 0.0
    %404 = vmatmul.mubr.f32.gmra.mrb[0].mxu0 %v312
    %v405 = vpop.f32.mrb[0].mxu0
    %v406 = vadd.f32 %v304, %v405
    %v407 = vpop.f32.mrb[0].mxu0
    %408 = vmatprep.mubr.f32.mxu0 0.0
    %409 = vmatmul.mubr.f32.gmra.mrb[0].mxu0 %v315
    %v410 = vpop.f32.mrb[0].mxu0
    %v411 = vadd.f32 %v304, %v410
    %v412 = vpop.f32.mrb[0].mxu0
    %413 = vmatprep.mubr.f32.mxu0 0.0
    %414 = vmatmul.mubr.f32.gmra.mrb[0].mxu0 %v318
    %v415 = vpop.f32.mrb[0].mxu0
    %v416 = vadd.f32 %v304, %v415
    %v417 = vpop.f32.mrb[0].mxu0
    %418 = vmatprep.mubr.f32.mxu0 0.0
    %419 = vmatmul.mubr.f32.gmra.mrb[0].mxu0 %v321
    %v420 = vpop.f32.mrb[0].mxu0
    %v421 = vadd.f32 %v304, %v420
    %v422 = vpop.f32.mrb[0].mxu0
    %423 = vmatprep.mubr.f32.mxu0 0.0
    %424 = vmatmul.mubr.f32.gmra.mrb[0].mxu0 %v324
    %v425 = vpop.f32.mrb[0].mxu0
    %v426 = vadd.f32 %v304, %v425
    %v427 = vpop.f32.mrb[0].mxu0
    %428 = vmatprep.mubr.f32.mxu0 0.0
    %429 = vmatmul.mubr.f32.gmra.mrb[0].mxu0 %v327
    %v430 = vpop.f32.mrb[0].mxu0
    %v431 = vadd.f32 %v304, %v430
    %v432 = vpop.f32.mrb[0].mxu0
    %433 = vdwg.mxu0
    %v434 = vld [vmem:[#allocation2 + $0x10] sm:$0xff]
    %v435 = vld [vmem:[#allocation2 + $0x18] sm:$0xff]
    %v436 = vld [vmem:[#allocation2 + $0x20] sm:$0xff]
    %v437 = vld [vmem:[#allocation2 + $0x28] sm:$0xff]
    %v439 = vsel %vm132, 0.0, 0
    %441 = vmatprep.subr.mxu0 0.0
    %442 = vmatpush1.msra.mxu0 %v434
    %443 = vmatprep.subr.mxu0 0.0
    %444 = vmatpush1.msra.mxu0 %v435
    %445 = vmatprep.subr.mxu0 0.0
    %446 = vmatpush1.msra.mxu0 %v436
    %447 = vmatprep.subr.mxu0 0.0
    %448 = vmatpush1.msra.mxu0 %v437
    %449 = vmatprep.subr.mxu0 0.0
    %450 = vmatpush1.msra.mxu0 0.0
    %451 = vmatprep.subr.mxu0 0.0
    %452 = vmatpush1.msra.mxu0 0.0
    %453 = vmatprep.subr.mxu0 0.0
    %454 = vmatpush1.msra.mxu0 0.0
    %455 = vmatprep.subr.mxu0 0.0
    %456 = vmatpush1.msra.mxu0 0.0
    %457 = vmatprep.subr.mxu0 0.0
    %458 = vmatpush1.msra.mxu0 0.0
    %459 = vmatprep.subr.mxu0 0.0
    %460 = vmatpush1.msra.mxu0 0.0
    %461 = vmatprep.subr.mxu0 0.0
    %462 = vmatpush1.msra.mxu0 0.0
    %463 = vmatprep.subr.mxu0 0.0
    %464 = vmatpush1.msra.mxu0 0.0
    %465 = vmatprep.subr.mxu0 0.0
    %466 = vmatpush1.msra.mxu0 0.0
    %467 = vmatprep.subr.mxu0 0.0
    %468 = vmatpush1.msra.mxu0 0.0
    %469 = vmatprep.subr.mxu0 0.0
    %470 = vmatpush1.msra.mxu0 0.0
    %471 = vmatprep.subr.mxu0 0.0
    %472 = vmatpush1.msra.mxu0 0.0
    %473 = vmatprep.subr.mxu0 0.0
    %474 = vmatpush1.msra.mxu0 0.0
    %475 = vmatprep.subr.mxu0 0.0
    %476 = vmatpush1.msra.mxu0 0.0
    %477 = vmatprep.subr.mxu0 0.0
    %478 = vmatpush1.msra.mxu0 0.0
    %479 = vmatprep.subr.mxu0 0.0
    %480 = vmatpush1.msra.mxu0 0.0
    %481 = vmatprep.subr.mxu0 0.0
    %482 = vmatpush1.msra.mxu0 0.0
    %483 = vmatprep.subr.mxu0 0.0
    %484 = vmatpush1.msra.mxu0 0.0
    %485 = vmatprep.subr.mxu0 0.0
    %486 = vmatpush1.msra.mxu0 0.0
    %487 = vmatprep.subr.mxu0 0.0
    %488 = vmatpush1.msra.mxu0 0.0
    %489 = vmatprep.subr.mxu0 0.0
    %490 = vmatpush1.msra.mxu0 0.0
    %491 = vmatprep.subr.mxu0 0.0
    %492 = vmatpush1.msra.mxu0 0.0
    %493 = vmatprep.subr.mxu0 0.0
    %494 = vmatpush1.msra.mxu0 0.0
    %495 = vmatprep.subr.mxu0 0.0
    %496 = vmatpush1.msra.mxu0 0.0
    %497 = vmatprep.subr.mxu0 0.0
    %498 = vmatpush1.msra.mxu0 0.0
    %499 = vmatprep.subr.mxu0 0.0
    %500 = vmatpush1.msra.mxu0 0.0
    %501 = vmatprep.subr.mxu0 0.0
    %502 = vmatpush1.msra.mxu0 0.0
    %503 = vmatprep.subr.mxu0 0.0
    %504 = vmatpush1.msra.mxu0 0.0
    %505 = vmatprep.mubr.f32.mxu0 0.0
    %506 = vmatmul.mubr.f32.gmra.mrb[0].mxu0 %v439
    %v507 = vpop.f32.mrb[0].mxu0
    %v508 = vadd.f32 0.0, %v507
    %v509 = vpop.f32.mrb[0].mxu0
    %510 = vdwg.mxu0
    %v511 = vadd.f32 %v396, %v508
    %v512 = vxor.u32 %v511, 2147483648
    %v513 = vmul.f32 %v512, 1.442695
    %v514 = vpow.pop %v513
    %v515 = vadd.f32 %v514, 1.0
    %v516 = vrcp.pop %v515
    %v517 = vmul.f32 1.0, %v516
    %v518 = vtanh.pop %v511
    %v519 = vmul.f32 %v517, 0.0
    %521 = vrot.lane.b32.xlu0 %v518, 64
    %v522 = vpop.permute.xlu0 %521
    %v524 = vmul.f32 %v517, %v522
    %526 = vrot.lane.b32.xlu0 %v524, 32
    %v527 = vpop.permute.xlu0 %526
    %v529 = vadd.f32 %v519, %v527
    %v530 = vtanh.pop %v529
    %532 = vrot.lane.b32.xlu0 %v530, 64
    %v533 = vpop.permute.xlu0 %532
    %v535 = vmul.f32 %v517, %v533
    %537 = vrot.lane.b32.xlu0 %v535, 32
    %v538 = vpop.permute.xlu0 %537
    %v539 = vsel %vm132, %v538, 0
    %541 = vmatprep.subr.mxu0 0.0
    %542 = vmatpush1.msra.mxu0 %v434
    %543 = vmatprep.subr.mxu0 0.0
    %544 = vmatpush1.msra.mxu0 %v435
    %545 = vmatprep.subr.mxu0 0.0
    %546 = vmatpush1.msra.mxu0 %v436
    %547 = vmatprep.subr.mxu0 0.0
    %548 = vmatpush1.msra.mxu0 %v437
    %549 = vmatprep.subr.mxu0 0.0
    %550 = vmatpush1.msra.mxu0 0.0
    %551 = vmatprep.subr.mxu0 0.0
    %552 = vmatpush1.msra.mxu0 0.0
    %553 = vmatprep.subr.mxu0 0.0
    %554 = vmatpush1.msra.mxu0 0.0
    %555 = vmatprep.subr.mxu0 0.0
    %556 = vmatpush1.msra.mxu0 0.0
    %557 = vmatprep.subr.mxu0 0.0
    %558 = vmatpush1.msra.mxu0 0.0
    %559 = vmatprep.subr.mxu0 0.0
    %560 = vmatpush1.msra.mxu0 0.0
    %561 = vmatprep.subr.mxu0 0.0
    %562 = vmatpush1.msra.mxu0 0.0
    %563 = vmatprep.subr.mxu0 0.0
    %564 = vmatpush1.msra.mxu0 0.0
    %565 = vmatprep.subr.mxu0 0.0
    %566 = vmatpush1.msra.mxu0 0.0
    %567 = vmatprep.subr.mxu0 0.0
    %568 = vmatpush1.msra.mxu0 0.0
    %569 = vmatprep.subr.mxu0 0.0
    %570 = vmatpush1.msra.mxu0 0.0
    %571 = vmatprep.subr.mxu0 0.0
    %572 = vmatpush1.msra.mxu0 0.0
    %573 = vmatprep.subr.mxu0 0.0
    %574 = vmatpush1.msra.mxu0 0.0
    %575 = vmatprep.subr.mxu0 0.0
    %576 = vmatpush1.msra.mxu0 0.0
    %577 = vmatprep.subr.mxu0 0.0
    %578 = vmatpush1.msra.mxu0 0.0
    %579 = vmatprep.subr.mxu0 0.0
    %580 = vmatpush1.msra.mxu0 0.0
    %581 = vmatprep.subr.mxu0 0.0
    %582 = vmatpush1.msra.mxu0 0.0
    %583 = vmatprep.subr.mxu0 0.0
    %584 = vmatpush1.msra.mxu0 0.0
    %585 = vmatprep.subr.mxu0 0.0
    %586 = vmatpush1.msra.mxu0 0.0
    %587 = vmatprep.subr.mxu0 0.0
    %588 = vmatpush1.msra.mxu0 0.0
    %589 = vmatprep.subr.mxu0 0.0
    %590 = vmatpush1.msra.mxu0 0.0
    %591 = vmatprep.subr.mxu0 0.0
    %592 = vmatpush1.msra.mxu0 0.0
    %593 = vmatprep.subr.mxu0 0.0
    %594 = vmatpush1.msra.mxu0 0.0
    %595 = vmatprep.subr.mxu0 0.0
    %596 = vmatpush1.msra.mxu0 0.0
    %597 = vmatprep.subr.mxu0 0.0
    %598 = vmatpush1.msra.mxu0 0.0
    %599 = vmatprep.subr.mxu0 0.0
    %600 = vmatpush1.msra.mxu0 0.0
    %601 = vmatprep.subr.mxu0 0.0
    %602 = vmatpush1.msra.mxu0 0.0
    %603 = vmatprep.subr.mxu0 0.0
    %604 = vmatpush1.msra.mxu0 0.0
    %605 = vmatprep.mubr.f32.mxu0 0.0
    %606 = vmatmul.mubr.f32.gmra.mrb[0].mxu0 %v539
    %v607 = vpop.f32.mrb[0].mxu0
    %v608 = vadd.f32 0.0, %v607
    %v609 = vpop.f32.mrb[0].mxu0
    %610 = vdwg.mxu0
    %v611 = vadd.f32 %v401, %v608
    %v612 = vxor.u32 %v611, 2147483648
    %v613 = vmul.f32 %v612, 1.442695
    %v614 = vpow.pop %v613
    %v615 = vadd.f32 %v614, 1.0
    %v616 = vrcp.pop %v615
    %v617 = vmul.f32 1.0, %v616
    %v618 = vtanh.pop %v611
    %v619 = vmul.f32 %v617, %v529
    %621 = vrot.lane.b32.xlu0 %v618, 64
    %v622 = vpop.permute.xlu0 %621
    %v624 = vmul.f32 %v617, %v622
    %626 = vrot.lane.b32.xlu0 %v624, 32
    %v627 = vpop.permute.xlu0 %626
    %v629 = vadd.f32 %v619, %v627
    %v630 = vtanh.pop %v629
    %632 = vrot.lane.b32.xlu0 %v630, 64
    %v633 = vpop.permute.xlu0 %632
    %v635 = vmul.f32 %v617, %v633
    %637 = vrot.lane.b32.xlu0 %v635, 32
    %v638 = vpop.permute.xlu0 %637
    %v639 = vsel %vm132, %v638, 0
    %641 = vmatprep.subr.mxu0 0.0
    %642 = vmatpush1.msra.mxu0 %v434
    %643 = vmatprep.subr.mxu0 0.0
    %644 = vmatpush1.msra.mxu0 %v435
    %645 = vmatprep.subr.mxu0 0.0
    %646 = vmatpush1.msra.mxu0 %v436
    %647 = vmatprep.subr.mxu0 0.0
    %648 = vmatpush1.msra.mxu0 %v437
    %649 = vmatprep.subr.mxu0 0.0
    %650 = vmatpush1.msra.mxu0 0.0
    %651 = vmatprep.subr.mxu0 0.0
    %652 = vmatpush1.msra.mxu0 0.0
    %653 = vmatprep.subr.mxu0 0.0
    %654 = vmatpush1.msra.mxu0 0.0
    %655 = vmatprep.subr.mxu0 0.0
    %656 = vmatpush1.msra.mxu0 0.0
    %657 = vmatprep.subr.mxu0 0.0
    %658 = vmatpush1.msra.mxu0 0.0
    %659 = vmatprep.subr.mxu0 0.0
    %660 = vmatpush1.msra.mxu0 0.0
    %661 = vmatprep.subr.mxu0 0.0
    %662 = vmatpush1.msra.mxu0 0.0
    %663 = vmatprep.subr.mxu0 0.0
    %664 = vmatpush1.msra.mxu0 0.0
    %665 = vmatprep.subr.mxu0 0.0
    %666 = vmatpush1.msra.mxu0 0.0
    %667 = vmatprep.subr.mxu0 0.0
    %668 = vmatpush1.msra.mxu0 0.0
    %669 = vmatprep.subr.mxu0 0.0
    %670 = vmatpush1.msra.mxu0 0.0
    %671 = vmatprep.subr.mxu0 0.0
    %672 = vmatpush1.msra.mxu0 0.0
    %673 = vmatprep.subr.mxu0 0.0
    %674 = vmatpush1.msra.mxu0 0.0
    %675 = vmatprep.subr.mxu0 0.0
    %676 = vmatpush1.msra.mxu0 0.0
    %677 = vmatprep.subr.mxu0 0.0
    %678 = vmatpush1.msra.mxu0 0.0
    %679 = vmatprep.subr.mxu0 0.0
    %680 = vmatpush1.msra.mxu0 0.0
    %681 = vmatprep.subr.mxu0 0.0
    %682 = vmatpush1.msra.mxu0 0.0
    %683 = vmatprep.subr.mxu0 0.0
    %684 = vmatpush1.msra.mxu0 0.0
    %685 = vmatprep.subr.mxu0 0.0
    %686 = vmatpush1.msra.mxu0 0.0
    %687 = vmatprep.subr.mxu0 0.0
    %688 = vmatpush1.msra.mxu0 0.0
    %689 = vmatprep.subr.mxu0 0.0
    %690 = vmatpush1.msra.mxu0 0.0
    %691 = vmatprep.subr.mxu0 0.0
    %692 = vmatpush1.msra.mxu0 0.0
    %693 = vmatprep.subr.mxu0 0.0
    %694 = vmatpush1.msra.mxu0 0.0
    %695 = vmatprep.subr.mxu0 0.0
    %696 = vmatpush1.msra.mxu0 0.0
    %697 = vmatprep.subr.mxu0 0.0
    %698 = vmatpush1.msra.mxu0 0.0
    %699 = vmatprep.subr.mxu0 0.0
    %700 = vmatpush1.msra.mxu0 0.0
    %701 = vmatprep.subr.mxu0 0.0
    %702 = vmatpush1.msra.mxu0 0.0
    %703 = vmatprep.subr.mxu0 0.0
    %704 = vmatpush1.msra.mxu0 0.0
    %705 = vmatprep.mubr.f32.mxu0 0.0
    %706 = vmatmul.mubr.f32.gmra.mrb[0].mxu0 %v639
    %v707 = vpop.f32.mrb[0].mxu0
    %v708 = vadd.f32 0.0, %v707
    %v709 = vpop.f32.mrb[0].mxu0
    %710 = vdwg.mxu0
    %v711 = vadd.f32 %v406, %v708
    %v712 = vxor.u32 %v711, 2147483648
    %v713 = vmul.f32 %v712, 1.442695
    %v714 = vpow.pop %v713
    %v715 = vadd.f32 %v714, 1.0
    %v716 = vrcp.pop %v715
    %v717 = vmul.f32 1.0, %v716
    %v718 = vtanh.pop %v711
    %v719 = vmul.f32 %v717, %v629
    %721 = vrot.lane.b32.xlu0 %v718, 64
    %v722 = vpop.permute.xlu0 %721
    %v724 = vmul.f32 %v717, %v722
    %726 = vrot.lane.b32.xlu0 %v724, 32
    %v727 = vpop.permute.xlu0 %726
    %v729 = vadd.f32 %v719, %v727
    %v730 = vtanh.pop %v729
    %732 = vrot.lane.b32.xlu0 %v730, 64
    %v733 = vpop.permute.xlu0 %732
    %v735 = vmul.f32 %v717, %v733
    %737 = vrot.lane.b32.xlu0 %v735, 32
    %v738 = vpop.permute.xlu0 %737
    %v739 = vsel %vm132, %v738, 0
    %741 = vmatprep.subr.mxu0 0.0
    %742 = vmatpush1.msra.mxu0 %v434
    %743 = vmatprep.subr.mxu0 0.0
    %744 = vmatpush1.msra.mxu0 %v435
    %745 = vmatprep.subr.mxu0 0.0
    %746 = vmatpush1.msra.mxu0 %v436
    %747 = vmatprep.subr.mxu0 0.0
    %748 = vmatpush1.msra.mxu0 %v437
    %749 = vmatprep.subr.mxu0 0.0
    %750 = vmatpush1.msra.mxu0 0.0
    %751 = vmatprep.subr.mxu0 0.0
    %752 = vmatpush1.msra.mxu0 0.0
    %753 = vmatprep.subr.mxu0 0.0
    %754 = vmatpush1.msra.mxu0 0.0
    %755 = vmatprep.subr.mxu0 0.0
    %756 = vmatpush1.msra.mxu0 0.0
    %757 = vmatprep.subr.mxu0 0.0
    %758 = vmatpush1.msra.mxu0 0.0
    %759 = vmatprep.subr.mxu0 0.0
    %760 = vmatpush1.msra.mxu0 0.0
    %761 = vmatprep.subr.mxu0 0.0
    %762 = vmatpush1.msra.mxu0 0.0
    %763 = vmatprep.subr.mxu0 0.0
    %764 = vmatpush1.msra.mxu0 0.0
    %765 = vmatprep.subr.mxu0 0.0
    %766 = vmatpush1.msra.mxu0 0.0
    %767 = vmatprep.subr.mxu0 0.0
    %768 = vmatpush1.msra.mxu0 0.0
    %769 = vmatprep.subr.mxu0 0.0
    %770 = vmatpush1.msra.mxu0 0.0
    %771 = vmatprep.subr.mxu0 0.0
    %772 = vmatpush1.msra.mxu0 0.0
    %773 = vmatprep.subr.mxu0 0.0
    %774 = vmatpush1.msra.mxu0 0.0
    %775 = vmatprep.subr.mxu0 0.0
    %776 = vmatpush1.msra.mxu0 0.0
    %777 = vmatprep.subr.mxu0 0.0
    %778 = vmatpush1.msra.mxu0 0.0
    %779 = vmatprep.subr.mxu0 0.0
    %780 = vmatpush1.msra.mxu0 0.0
    %781 = vmatprep.subr.mxu0 0.0
    %782 = vmatpush1.msra.mxu0 0.0
    %783 = vmatprep.subr.mxu0 0.0
    %784 = vmatpush1.msra.mxu0 0.0
    %785 = vmatprep.subr.mxu0 0.0
    %786 = vmatpush1.msra.mxu0 0.0
    %787 = vmatprep.subr.mxu0 0.0
    %788 = vmatpush1.msra.mxu0 0.0
    %789 = vmatprep.subr.mxu0 0.0
    %790 = vmatpush1.msra.mxu0 0.0
    %791 = vmatprep.subr.mxu0 0.0
    %792 = vmatpush1.msra.mxu0 0.0
    %793 = vmatprep.subr.mxu0 0.0
    %794 = vmatpush1.msra.mxu0 0.0
    %795 = vmatprep.subr.mxu0 0.0
    %796 = vmatpush1.msra.mxu0 0.0
    %797 = vmatprep.subr.mxu0 0.0
    %798 = vmatpush1.msra.mxu0 0.0
    %799 = vmatprep.subr.mxu0 0.0
    %800 = vmatpush1.msra.mxu0 0.0
    %801 = vmatprep.subr.mxu0 0.0
    %802 = vmatpush1.msra.mxu0 0.0
    %803 = vmatprep.subr.mxu0 0.0
    %804 = vmatpush1.msra.mxu0 0.0
    %805 = vmatprep.mubr.f32.mxu0 0.0
    %806 = vmatmul.mubr.f32.gmra.mrb[0].mxu0 %v739
    %v807 = vpop.f32.mrb[0].mxu0
    %v808 = vadd.f32 0.0, %v807
    %v809 = vpop.f32.mrb[0].mxu0
    %810 = vdwg.mxu0
    %v811 = vadd.f32 %v411, %v808
    %v812 = vxor.u32 %v811, 2147483648
    %v813 = vmul.f32 %v812, 1.442695
    %v814 = vpow.pop %v813
    %v815 = vadd.f32 %v814, 1.0
    %v816 = vrcp.pop %v815
    %v817 = vmul.f32 1.0, %v816
    %v818 = vtanh.pop %v811
    %v819 = vmul.f32 %v817, %v729
    %821 = vrot.lane.b32.xlu0 %v818, 64
    %v822 = vpop.permute.xlu0 %821
    %v824 = vmul.f32 %v817, %v822
    %826 = vrot.lane.b32.xlu0 %v824, 32
    %v827 = vpop.permute.xlu0 %826
    %v829 = vadd.f32 %v819, %v827
    %v830 = vtanh.pop %v829
    %832 = vrot.lane.b32.xlu0 %v830, 64
    %v833 = vpop.permute.xlu0 %832
    %v835 = vmul.f32 %v817, %v833
    %837 = vrot.lane.b32.xlu0 %v835, 32
    %v838 = vpop.permute.xlu0 %837
    %v839 = vsel %vm132, %v838, 0
    %841 = vmatprep.subr.mxu0 0.0
    %842 = vmatpush1.msra.mxu0 %v434
    %843 = vmatprep.subr.mxu0 0.0
    %844 = vmatpush1.msra.mxu0 %v435
    %845 = vmatprep.subr.mxu0 0.0
    %846 = vmatpush1.msra.mxu0 %v436
    %847 = vmatprep.subr.mxu0 0.0
    %848 = vmatpush1.msra.mxu0 %v437
    %849 = vmatprep.subr.mxu0 0.0
    %850 = vmatpush1.msra.mxu0 0.0
    %851 = vmatprep.subr.mxu0 0.0
    %852 = vmatpush1.msra.mxu0 0.0
    %853 = vmatprep.subr.mxu0 0.0
    %854 = vmatpush1.msra.mxu0 0.0
    %855 = vmatprep.subr.mxu0 0.0
    %856 = vmatpush1.msra.mxu0 0.0
    %857 = vmatprep.subr.mxu0 0.0
    %858 = vmatpush1.msra.mxu0 0.0
    %859 = vmatprep.subr.mxu0 0.0
    %860 = vmatpush1.msra.mxu0 0.0
    %861 = vmatprep.subr.mxu0 0.0
    %862 = vmatpush1.msra.mxu0 0.0
    %863 = vmatprep.subr.mxu0 0.0
    %864 = vmatpush1.msra.mxu0 0.0
    %865 = vmatprep.subr.mxu0 0.0
    %866 = vmatpush1.msra.mxu0 0.0
    %867 = vmatprep.subr.mxu0 0.0
    %868 = vmatpush1.msra.mxu0 0.0
    %869 = vmatprep.subr.mxu0 0.0
    %870 = vmatpush1.msra.mxu0 0.0
    %871 = vmatprep.subr.mxu0 0.0
    %872 = vmatpush1.msra.mxu0 0.0
    %873 = vmatprep.subr.mxu0 0.0
    %874 = vmatpush1.msra.mxu0 0.0
    %875 = vmatprep.subr.mxu0 0.0
    %876 = vmatpush1.msra.mxu0 0.0
    %877 = vmatprep.subr.mxu0 0.0
    %878 = vmatpush1.msra.mxu0 0.0
    %879 = vmatprep.subr.mxu0 0.0
    %880 = vmatpush1.msra.mxu0 0.0
    %881 = vmatprep.subr.mxu0 0.0
    %882 = vmatpush1.msra.mxu0 0.0
    %883 = vmatprep.subr.mxu0 0.0
    %884 = vmatpush1.msra.mxu0 0.0
    %885 = vmatprep.subr.mxu0 0.0
    %886 = vmatpush1.msra.mxu0 0.0
    %887 = vmatprep.subr.mxu0 0.0
    %888 = vmatpush1.msra.mxu0 0.0
    %889 = vmatprep.subr.mxu0 0.0
    %890 = vmatpush1.msra.mxu0 0.0
    %891 = vmatprep.subr.mxu0 0.0
    %892 = vmatpush1.msra.mxu0 0.0
    %893 = vmatprep.subr.mxu0 0.0
    %894 = vmatpush1.msra.mxu0 0.0
    %895 = vmatprep.subr.mxu0 0.0
    %896 = vmatpush1.msra.mxu0 0.0
    %897 = vmatprep.subr.mxu0 0.0
    %898 = vmatpush1.msra.mxu0 0.0
    %899 = vmatprep.subr.mxu0 0.0
    %900 = vmatpush1.msra.mxu0 0.0
    %901 = vmatprep.subr.mxu0 0.0
    %902 = vmatpush1.msra.mxu0 0.0
    %903 = vmatprep.subr.mxu0 0.0
    %904 = vmatpush1.msra.mxu0 0.0
    %905 = vmatprep.mubr.f32.mxu0 0.0
    %906 = vmatmul.mubr.f32.gmra.mrb[0].mxu0 %v839
    %v907 = vpop.f32.mrb[0].mxu0
    %v908 = vadd.f32 0.0, %v907
    %v909 = vpop.f32.mrb[0].mxu0
    %910 = vdwg.mxu0
    %v911 = vadd.f32 %v416, %v908
    %v912 = vxor.u32 %v911, 2147483648
    %v913 = vmul.f32 %v912, 1.442695
    %v914 = vpow.pop %v913
    %v915 = vadd.f32 %v914, 1.0
    %v916 = vrcp.pop %v915
    %v917 = vmul.f32 1.0, %v916
    %v918 = vtanh.pop %v911
    %v919 = vmul.f32 %v917, %v829
    %921 = vrot.lane.b32.xlu0 %v918, 64
    %v922 = vpop.permute.xlu0 %921
    %v924 = vmul.f32 %v917, %v922
    %926 = vrot.lane.b32.xlu0 %v924, 32
    %v927 = vpop.permute.xlu0 %926
    %v929 = vadd.f32 %v919, %v927
    %v930 = vtanh.pop %v929
    %932 = vrot.lane.b32.xlu0 %v930, 64
    %v933 = vpop.permute.xlu0 %932
    %v935 = vmul.f32 %v917, %v933
    %937 = vrot.lane.b32.xlu0 %v935, 32
    %v938 = vpop.permute.xlu0 %937
    %v939 = vsel %vm132, %v938, 0
    %941 = vmatprep.subr.mxu0 0.0
    %942 = vmatpush1.msra.mxu0 %v434
    %943 = vmatprep.subr.mxu0 0.0
    %944 = vmatpush1.msra.mxu0 %v435
    %945 = vmatprep.subr.mxu0 0.0
    %946 = vmatpush1.msra.mxu0 %v436
    %947 = vmatprep.subr.mxu0 0.0
    %948 = vmatpush1.msra.mxu0 %v437
    %949 = vmatprep.subr.mxu0 0.0
    %950 = vmatpush1.msra.mxu0 0.0
    %951 = vmatprep.subr.mxu0 0.0
    %952 = vmatpush1.msra.mxu0 0.0
    %953 = vmatprep.subr.mxu0 0.0
    %954 = vmatpush1.msra.mxu0 0.0
    %955 = vmatprep.subr.mxu0 0.0
    %956 = vmatpush1.msra.mxu0 0.0
    %957 = vmatprep.subr.mxu0 0.0
    %958 = vmatpush1.msra.mxu0 0.0
    %959 = vmatprep.subr.mxu0 0.0
    %960 = vmatpush1.msra.mxu0 0.0
    %961 = vmatprep.subr.mxu0 0.0
    %962 = vmatpush1.msra.mxu0 0.0
    %963 = vmatprep.subr.mxu0 0.0
    %964 = vmatpush1.msra.mxu0 0.0
    %965 = vmatprep.subr.mxu0 0.0
    %966 = vmatpush1.msra.mxu0 0.0
    %967 = vmatprep.subr.mxu0 0.0
    %968 = vmatpush1.msra.mxu0 0.0
    %969 = vmatprep.subr.mxu0 0.0
    %970 = vmatpush1.msra.mxu0 0.0
    %971 = vmatprep.subr.mxu0 0.0
    %972 = vmatpush1.msra.mxu0 0.0
    %973 = vmatprep.subr.mxu0 0.0
    %974 = vmatpush1.msra.mxu0 0.0
    %975 = vmatprep.subr.mxu0 0.0
    %976 = vmatpush1.msra.mxu0 0.0
    %977 = vmatprep.subr.mxu0 0.0
    %978 = vmatpush1.msra.mxu0 0.0
    %979 = vmatprep.subr.mxu0 0.0
    %980 = vmatpush1.msra.mxu0 0.0
    %981 = vmatprep.subr.mxu0 0.0
    %982 = vmatpush1.msra.mxu0 0.0
    %983 = vmatprep.subr.mxu0 0.0
    %984 = vmatpush1.msra.mxu0 0.0
    %985 = vmatprep.subr.mxu0 0.0
    %986 = vmatpush1.msra.mxu0 0.0
    %987 = vmatprep.subr.mxu0 0.0
    %988 = vmatpush1.msra.mxu0 0.0
    %989 = vmatprep.subr.mxu0 0.0
    %990 = vmatpush1.msra.mxu0 0.0
    %991 = vmatprep.subr.mxu0 0.0
    %992 = vmatpush1.msra.mxu0 0.0
    %993 = vmatprep.subr.mxu0 0.0
    %994 = vmatpush1.msra.mxu0 0.0
    %995 = vmatprep.subr.mxu0 0.0
    %996 = vmatpush1.msra.mxu0 0.0
    %997 = vmatprep.subr.mxu0 0.0
    %998 = vmatpush1.msra.mxu0 0.0
    %999 = vmatprep.subr.mxu0 0.0
    %1000 = vmatpush1.msra.mxu0 0.0
    %1001 = vmatprep.subr.mxu0 0.0
    %1002 = vmatpush1.msra.mxu0 0.0
    %1003 = vmatprep.subr.mxu0 0.0
    %1004 = vmatpush1.msra.mxu0 0.0
    %1005 = vmatprep.mubr.f32.mxu0 0.0
    %1006 = vmatmul.mubr.f32.gmra.mrb[0].mxu0 %v939
    %v1007 = vpop.f32.mrb[0].mxu0
    %v1008 = vadd.f32 0.0, %v1007
    %v1009 = vpop.f32.mrb[0].mxu0
    %1010 = vdwg.mxu0
    %v1011 = vadd.f32 %v421, %v1008
    %v1012 = vxor.u32 %v1011, 2147483648
    %v1013 = vmul.f32 %v1012, 1.442695
    %v1014 = vpow.pop %v1013
    %v1015 = vadd.f32 %v1014, 1.0
    %v1016 = vrcp.pop %v1015
    %v1017 = vmul.f32 1.0, %v1016
    %v1018 = vtanh.pop %v1011
    %v1019 = vmul.f32 %v1017, %v929
    %1021 = vrot.lane.b32.xlu0 %v1018, 64
    %v1022 = vpop.permute.xlu0 %1021
    %v1024 = vmul.f32 %v1017, %v1022
    %1026 = vrot.lane.b32.xlu0 %v1024, 32
    %v1027 = vpop.permute.xlu0 %1026
    %v1029 = vadd.f32 %v1019, %v1027
    %v1030 = vtanh.pop %v1029
    %1032 = vrot.lane.b32.xlu0 %v1030, 64
    %v1033 = vpop.permute.xlu0 %1032
    %v1035 = vmul.f32 %v1017, %v1033
    %1037 = vrot.lane.b32.xlu0 %v1035, 32
    %v1038 = vpop.permute.xlu0 %1037
    %v1039 = vsel %vm132, %v1038, 0
    %1041 = vmatprep.subr.mxu0 0.0
    %1042 = vmatpush1.msra.mxu0 %v434
    %1043 = vmatprep.subr.mxu0 0.0
    %1044 = vmatpush1.msra.mxu0 %v435
    %1045 = vmatprep.subr.mxu0 0.0
    %1046 = vmatpush1.msra.mxu0 %v436
    %1047 = vmatprep.subr.mxu0 0.0
    %1048 = vmatpush1.msra.mxu0 %v437
    %1049 = vmatprep.subr.mxu0 0.0
    %1050 = vmatpush1.msra.mxu0 0.0
    %1051 = vmatprep.subr.mxu0 0.0
    %1052 = vmatpush1.msra.mxu0 0.0
    %1053 = vmatprep.subr.mxu0 0.0
    %1054 = vmatpush1.msra.mxu0 0.0
    %1055 = vmatprep.subr.mxu0 0.0
    %1056 = vmatpush1.msra.mxu0 0.0
    %1057 = vmatprep.subr.mxu0 0.0
    %1058 = vmatpush1.msra.mxu0 0.0
    %1059 = vmatprep.subr.mxu0 0.0
    %1060 = vmatpush1.msra.mxu0 0.0
    %1061 = vmatprep.subr.mxu0 0.0
    %1062 = vmatpush1.msra.mxu0 0.0
    %1063 = vmatprep.subr.mxu0 0.0
    %1064 = vmatpush1.msra.mxu0 0.0
    %1065 = vmatprep.subr.mxu0 0.0
    %1066 = vmatpush1.msra.mxu0 0.0
    %1067 = vmatprep.subr.mxu0 0.0
    %1068 = vmatpush1.msra.mxu0 0.0
    %1069 = vmatprep.subr.mxu0 0.0
    %1070 = vmatpush1.msra.mxu0 0.0
    %1071 = vmatprep.subr.mxu0 0.0
    %1072 = vmatpush1.msra.mxu0 0.0
    %1073 = vmatprep.subr.mxu0 0.0
    %1074 = vmatpush1.msra.mxu0 0.0
    %1075 = vmatprep.subr.mxu0 0.0
    %1076 = vmatpush1.msra.mxu0 0.0
    %1077 = vmatprep.subr.mxu0 0.0
    %1078 = vmatpush1.msra.mxu0 0.0
    %1079 = vmatprep.subr.mxu0 0.0
    %1080 = vmatpush1.msra.mxu0 0.0
    %1081 = vmatprep.subr.mxu0 0.0
    %1082 = vmatpush1.msra.mxu0 0.0
    %1083 = vmatprep.subr.mxu0 0.0
    %1084 = vmatpush1.msra.mxu0 0.0
    %1085 = vmatprep.subr.mxu0 0.0
    %1086 = vmatpush1.msra.mxu0 0.0
    %1087 = vmatprep.subr.mxu0 0.0
    %1088 = vmatpush1.msra.mxu0 0.0
    %1089 = vmatprep.subr.mxu0 0.0
    %1090 = vmatpush1.msra.mxu0 0.0
    %1091 = vmatprep.subr.mxu0 0.0
    %1092 = vmatpush1.msra.mxu0 0.0
    %1093 = vmatprep.subr.mxu0 0.0
    %1094 = vmatpush1.msra.mxu0 0.0
    %1095 = vmatprep.subr.mxu0 0.0
    %1096 = vmatpush1.msra.mxu0 0.0
    %1097 = vmatprep.subr.mxu0 0.0
    %1098 = vmatpush1.msra.mxu0 0.0
    %1099 = vmatprep.subr.mxu0 0.0
    %1100 = vmatpush1.msra.mxu0 0.0
    %1101 = vmatprep.subr.mxu0 0.0
    %1102 = vmatpush1.msra.mxu0 0.0
    %1103 = vmatprep.subr.mxu0 0.0
    %1104 = vmatpush1.msra.mxu0 0.0
    %1105 = vmatprep.mubr.f32.mxu0 0.0
    %1106 = vmatmul.mubr.f32.gmra.mrb[0].mxu0 %v1039
    %v1107 = vpop.f32.mrb[0].mxu0
    %v1108 = vadd.f32 0.0, %v1107
    %v1109 = vpop.f32.mrb[0].mxu0
    %1110 = vdwg.mxu0
    %v1111 = vadd.f32 %v426, %v1108
    %v1112 = vxor.u32 %v1111, 2147483648
    %v1113 = vmul.f32 %v1112, 1.442695
    %v1114 = vpow.pop %v1113
    %v1115 = vadd.f32 %v1114, 1.0
    %v1116 = vrcp.pop %v1115
    %v1117 = vmul.f32 1.0, %v1116
    %v1118 = vtanh.pop %v1111
    %v1119 = vmul.f32 %v1117, %v1029
    %1121 = vrot.lane.b32.xlu0 %v1118, 64
    %v1122 = vpop.permute.xlu0 %1121
    %v1124 = vmul.f32 %v1117, %v1122
    %1126 = vrot.lane.b32.xlu0 %v1124, 32
    %v1127 = vpop.permute.xlu0 %1126
    %v1129 = vadd.f32 %v1119, %v1127
    %v1130 = vtanh.pop %v1129
    %1132 = vrot.lane.b32.xlu0 %v1130, 64
    %v1133 = vpop.permute.xlu0 %1132
    %v1135 = vmul.f32 %v1117, %v1133
    %1137 = vrot.lane.b32.xlu0 %v1135, 32
    %v1138 = vpop.permute.xlu0 %1137
    %v1139 = vsel %vm132, %v1138, 0
    %1141 = vmatprep.subr.mxu0 0.0
    %1142 = vmatpush1.msra.mxu0 %v434
    %1143 = vmatprep.subr.mxu0 0.0
    %1144 = vmatpush1.msra.mxu0 %v435
    %1145 = vmatprep.subr.mxu0 0.0
    %1146 = vmatpush1.msra.mxu0 %v436
    %1147 = vmatprep.subr.mxu0 0.0
    %1148 = vmatpush1.msra.mxu0 %v437
    %1149 = vmatprep.subr.mxu0 0.0
    %1150 = vmatpush1.msra.mxu0 0.0
    %1151 = vmatprep.subr.mxu0 0.0
    %1152 = vmatpush1.msra.mxu0 0.0
    %1153 = vmatprep.subr.mxu0 0.0
    %1154 = vmatpush1.msra.mxu0 0.0
    %1155 = vmatprep.subr.mxu0 0.0
    %1156 = vmatpush1.msra.mxu0 0.0
    %1157 = vmatprep.subr.mxu0 0.0
    %1158 = vmatpush1.msra.mxu0 0.0
    %1159 = vmatprep.subr.mxu0 0.0
    %1160 = vmatpush1.msra.mxu0 0.0
    %1161 = vmatprep.subr.mxu0 0.0
    %1162 = vmatpush1.msra.mxu0 0.0
    %1163 = vmatprep.subr.mxu0 0.0
    %1164 = vmatpush1.msra.mxu0 0.0
    %1165 = vmatprep.subr.mxu0 0.0
    %1166 = vmatpush1.msra.mxu0 0.0
    %1167 = vmatprep.subr.mxu0 0.0
    %1168 = vmatpush1.msra.mxu0 0.0
    %1169 = vmatprep.subr.mxu0 0.0
    %1170 = vmatpush1.msra.mxu0 0.0
    %1171 = vmatprep.subr.mxu0 0.0
    %1172 = vmatpush1.msra.mxu0 0.0
    %1173 = vmatprep.subr.mxu0 0.0
    %1174 = vmatpush1.msra.mxu0 0.0
    %1175 = vmatprep.subr.mxu0 0.0
    %1176 = vmatpush1.msra.mxu0 0.0
    %1177 = vmatprep.subr.mxu0 0.0
    %1178 = vmatpush1.msra.mxu0 0.0
    %1179 = vmatprep.subr.mxu0 0.0
    %1180 = vmatpush1.msra.mxu0 0.0
    %1181 = vmatprep.subr.mxu0 0.0
    %1182 = vmatpush1.msra.mxu0 0.0
    %1183 = vmatprep.subr.mxu0 0.0
    %1184 = vmatpush1.msra.mxu0 0.0
    %1185 = vmatprep.subr.mxu0 0.0
    %1186 = vmatpush1.msra.mxu0 0.0
    %1187 = vmatprep.subr.mxu0 0.0
    %1188 = vmatpush1.msra.mxu0 0.0
    %1189 = vmatprep.subr.mxu0 0.0
    %1190 = vmatpush1.msra.mxu0 0.0
    %1191 = vmatprep.subr.mxu0 0.0
    %1192 = vmatpush1.msra.mxu0 0.0
    %1193 = vmatprep.subr.mxu0 0.0
    %1194 = vmatpush1.msra.mxu0 0.0
    %1195 = vmatprep.subr.mxu0 0.0
    %1196 = vmatpush1.msra.mxu0 0.0
    %1197 = vmatprep.subr.mxu0 0.0
    %1198 = vmatpush1.msra.mxu0 0.0
    %1199 = vmatprep.subr.mxu0 0.0
    %1200 = vmatpush1.msra.mxu0 0.0
    %1201 = vmatprep.subr.mxu0 0.0
    %1202 = vmatpush1.msra.mxu0 0.0
    %1203 = vmatprep.subr.mxu0 0.0
    %1204 = vmatpush1.msra.mxu0 0.0
    %1205 = vmatprep.mubr.f32.mxu0 0.0
    %1206 = vmatmul.mubr.f32.gmra.mrb[0].mxu0 %v1139
    %v1207 = vpop.f32.mrb[0].mxu0
    %v1208 = vadd.f32 0.0, %v1207
    %v1209 = vpop.f32.mrb[0].mxu0
    %1210 = vdwg.mxu0
    %v1211 = vadd.f32 %v431, %v1208
    %v1212 = vxor.u32 %v1211, 2147483648
    %v1213 = vmul.f32 %v1212, 1.442695
    %v1214 = vpow.pop %v1213
    %v1215 = vadd.f32 %v1214, 1.0
    %v1216 = vrcp.pop %v1215
    %v1217 = vmul.f32 1.0, %v1216
    %v1218 = vtanh.pop %v1211
    %v1219 = vmul.f32 %v1217, %v1129
    %1221 = vrot.lane.b32.xlu0 %v1218, 64
    %v1222 = vpop.permute.xlu0 %1221
    %v1224 = vmul.f32 %v1217, %v1222
    %1226 = vrot.lane.b32.xlu0 %v1224, 32
    %v1227 = vpop.permute.xlu0 %1226
    %v1229 = vadd.f32 %v1219, %v1227
    %v1230 = vtanh.pop %v1229
    %1232 = vrot.lane.b32.xlu0 %v1230, 64
    %v1233 = vpop.permute.xlu0 %1232
    %v1235 = vmul.f32 %v1217, %v1233
    %v1236 = vld [vmem:[#allocation2 + $0x38] sm:$0xff]
    %v1237 = vld [vmem:[#allocation2 + $0x40] sm:$0xff]
    %v1238 = vld [vmem:[#allocation2 + $0x48] sm:$0xff]
    %v1239 = vld [vmem:[#allocation2 + $0x50] sm:$0xff]
    %v1240 = vld [vmem:[#allocation2 + $0x58] sm:$0x1]
    %v1241 = vlaneseq
    %v1242 = vshrl.u32 %v1241, 7
    %v1243 = vsub.s32 0, %v1242
    %v1244 = vrot.slane %v1240, %v1243
    %1246 = vrot.lane.b32.xlu0 %v1235, 32
    %v1247 = vpop.permute.xlu0 %1246
    %v1248 = vsel %vm132, %v1247, 0
    %1250 = vmatprep.subr.mxu0 0.0
    %1251 = vmatpush1.msra.mxu0 %v1236
    %1252 = vmatprep.subr.mxu0 0.0
    %1253 = vmatpush1.msra.mxu0 %v1237
    %1254 = vmatprep.subr.mxu0 0.0
    %1255 = vmatpush1.msra.mxu0 %v1238
    %1256 = vmatprep.subr.mxu0 0.0
    %1257 = vmatpush1.msra.mxu0 %v1239
    %1258 = vmatprep.subr.mxu0 0.0
    %1259 = vmatpush1.msra.mxu0 0.0
    %1260 = vmatprep.subr.mxu0 0.0
    %1261 = vmatpush1.msra.mxu0 0.0
    %1262 = vmatprep.subr.mxu0 0.0
    %1263 = vmatpush1.msra.mxu0 0.0
    %1264 = vmatprep.subr.mxu0 0.0
    %1265 = vmatpush1.msra.mxu0 0.0
    %1266 = vmatprep.subr.mxu0 0.0
    %1267 = vmatpush1.msra.mxu0 0.0
    %1268 = vmatprep.subr.mxu0 0.0
    %1269 = vmatpush1.msra.mxu0 0.0
    %1270 = vmatprep.subr.mxu0 0.0
    %1271 = vmatpush1.msra.mxu0 0.0
    %1272 = vmatprep.subr.mxu0 0.0
    %1273 = vmatpush1.msra.mxu0 0.0
    %1274 = vmatprep.subr.mxu0 0.0
    %1275 = vmatpush1.msra.mxu0 0.0
    %1276 = vmatprep.subr.mxu0 0.0
    %1277 = vmatpush1.msra.mxu0 0.0
    %1278 = vmatprep.subr.mxu0 0.0
    %1279 = vmatpush1.msra.mxu0 0.0
    %1280 = vmatprep.subr.mxu0 0.0
    %1281 = vmatpush1.msra.mxu0 0.0
    %1282 = vmatprep.subr.mxu0 0.0
    %1283 = vmatpush1.msra.mxu0 0.0
    %1284 = vmatprep.subr.mxu0 0.0
    %1285 = vmatpush1.msra.mxu0 0.0
    %1286 = vmatprep.subr.mxu0 0.0
    %1287 = vmatpush1.msra.mxu0 0.0
    %1288 = vmatprep.subr.mxu0 0.0
    %1289 = vmatpush1.msra.mxu0 0.0
    %1290 = vmatprep.subr.mxu0 0.0
    %1291 = vmatpush1.msra.mxu0 0.0
    %1292 = vmatprep.subr.mxu0 0.0
    %1293 = vmatpush1.msra.mxu0 0.0
    %1294 = vmatprep.subr.mxu0 0.0
    %1295 = vmatpush1.msra.mxu0 0.0
    %1296 = vmatprep.subr.mxu0 0.0
    %1297 = vmatpush1.msra.mxu0 0.0
    %1298 = vmatprep.subr.mxu0 0.0
    %1299 = vmatpush1.msra.mxu0 0.0
    %1300 = vmatprep.subr.mxu0 0.0
    %1301 = vmatpush1.msra.mxu0 0.0
    %1302 = vmatprep.subr.mxu0 0.0
    %1303 = vmatpush1.msra.mxu0 0.0
    %1304 = vmatprep.subr.mxu0 0.0
    %1305 = vmatpush1.msra.mxu0 0.0
    %1306 = vmatprep.subr.mxu0 0.0
    %1307 = vmatpush1.msra.mxu0 0.0
    %1308 = vmatprep.subr.mxu0 0.0
    %1309 = vmatpush1.msra.mxu0 0.0
    %1310 = vmatprep.subr.mxu0 0.0
    %1311 = vmatpush1.msra.mxu0 0.0
    %1312 = vmatprep.subr.mxu0 0.0
    %1313 = vmatpush1.msra.mxu0 0.0
    %1314 = vmatprep.mubr.f32.mxu0 0.0
    %1315 = vmatmul.mubr.f32.gmra.mrb[0].mxu0 %v1248
    %v1316 = vpop.f32.mrb[0].mxu0
    %v1317 = vadd.f32 %v1244, %v1316
    %v1318 = vpop.f32.mrb[0].mxu0
    %1319 = vdwg.mxu0
    %1321 = vrot.lane.b32.xlu0 %v1317, 32
    %v1322 = vpop.permute.xlu0 %1321
    %v1324 = vsel %vm132, %v289, %v1322
    %v1325 = vld [vmem:[#allocation2 + $0xd8] sm:$0xff]
    %v1326 = vld [vmem:[#allocation2 + $0xe0] sm:$0xff]
    %v1327 = vld [vmem:[#allocation2 + $0xe8] sm:$0xff]
    %v1328 = vld [vmem:[#allocation2 + $0xf0] sm:$0xff]
    %v1329 = vld [vmem:[#allocation2 + $0xf8] sm:$0xff]
    %v1330 = vld [vmem:[#allocation2 + $0x100] sm:$0xff]
    %v1331 = vld [vmem:[#allocation2 + $0x108] sm:$0xff]
    %v1332 = vld [vmem:[#allocation2 + $0x110] sm:$0xff]
    %v1333 = vld [vmem:[#allocation2 + $0x118] sm:$0x1]
    %v1334 = vlaneseq
    %v1335 = vshrl.u32 %v1334, 7
    %v1336 = vsub.s32 0, %v1335
    %v1337 = vrot.slane %v1333, %v1336
    %vm1338 = vcmask 523264
    %v1340 = vsel %vm1338, %v1324, 0
    %1342 = vmatprep.subr.mxu0 0.0
    %1343 = vmatpush1.msra.mxu0 %v1325
    %1344 = vmatprep.subr.mxu0 0.0
    %1345 = vmatpush1.msra.mxu0 %v1326
    %1346 = vmatprep.subr.mxu0 0.0
    %1347 = vmatpush1.msra.mxu0 %v1327
    %1348 = vmatprep.subr.mxu0 0.0
    %1349 = vmatpush1.msra.mxu0 %v1328
    %1350 = vmatprep.subr.mxu0 0.0
    %1351 = vmatpush1.msra.mxu0 %v1329
    %1352 = vmatprep.subr.mxu0 0.0
    %1353 = vmatpush1.msra.mxu0 %v1330
    %1354 = vmatprep.subr.mxu0 0.0
    %1355 = vmatpush1.msra.mxu0 %v1331
    %1356 = vmatprep.subr.mxu0 0.0
    %1357 = vmatpush1.msra.mxu0 %v1332
    %1358 = vmatprep.subr.mxu0 0.0
    %1359 = vmatpush1.msra.mxu0 0.0
    %1360 = vmatprep.subr.mxu0 0.0
    %1361 = vmatpush1.msra.mxu0 0.0
    %1362 = vmatprep.subr.mxu0 0.0
    %1363 = vmatpush1.msra.mxu0 0.0
    %1364 = vmatprep.subr.mxu0 0.0
    %1365 = vmatpush1.msra.mxu0 0.0
    %1366 = vmatprep.subr.mxu0 0.0
    %1367 = vmatpush1.msra.mxu0 0.0
    %1368 = vmatprep.subr.mxu0 0.0
    %1369 = vmatpush1.msra.mxu0 0.0
    %1370 = vmatprep.subr.mxu0 0.0
    %1371 = vmatpush1.msra.mxu0 0.0
    %1372 = vmatprep.subr.mxu0 0.0
    %1373 = vmatpush1.msra.mxu0 0.0
    %1374 = vmatprep.subr.mxu0 0.0
    %1375 = vmatpush1.msra.mxu0 0.0
    %1376 = vmatprep.subr.mxu0 0.0
    %1377 = vmatpush1.msra.mxu0 0.0
    %1378 = vmatprep.subr.mxu0 0.0
    %1379 = vmatpush1.msra.mxu0 0.0
    %1380 = vmatprep.subr.mxu0 0.0
    %1381 = vmatpush1.msra.mxu0 0.0
    %1382 = vmatprep.subr.mxu0 0.0
    %1383 = vmatpush1.msra.mxu0 0.0
    %1384 = vmatprep.subr.mxu0 0.0
    %1385 = vmatpush1.msra.mxu0 0.0
    %1386 = vmatprep.subr.mxu0 0.0
    %1387 = vmatpush1.msra.mxu0 0.0
    %1388 = vmatprep.subr.mxu0 0.0
    %1389 = vmatpush1.msra.mxu0 0.0
    %1390 = vmatprep.subr.mxu0 0.0
    %1391 = vmatpush1.msra.mxu0 0.0
    %1392 = vmatprep.subr.mxu0 0.0
    %1393 = vmatpush1.msra.mxu0 0.0
    %1394 = vmatprep.subr.mxu0 0.0
    %1395 = vmatpush1.msra.mxu0 0.0
    %1396 = vmatprep.subr.mxu0 0.0
    %1397 = vmatpush1.msra.mxu0 0.0
    %1398 = vmatprep.subr.mxu0 0.0
    %1399 = vmatpush1.msra.mxu0 0.0
    %1400 = vmatprep.subr.mxu0 0.0
    %1401 = vmatpush1.msra.mxu0 0.0
    %1402 = vmatprep.subr.mxu0 0.0
    %1403 = vmatpush1.msra.mxu0 0.0
    %1404 = vmatprep.subr.mxu0 0.0
    %1405 = vmatpush1.msra.mxu0 0.0
    %1406 = vmatprep.mubr.f32.mxu0 0.0
    %1407 = vmatmul.mubr.f32.gmra.mrb[0].mxu0 %v1340
    %v1408 = vpop.f32.mrb[0].mxu0
    %v1409 = vadd.f32 %v1337, %v1408
    %v1410 = vpop.f32.mrb[0].mxu0
    %1411 = vdwg.mxu0
    %v1412 = vmax.f32 %v1409, 0.0
    %v1413 = vld [vmem:[#allocation2 + $0x120] sm:$0xff]
    %v1414 = vld [vmem:[#allocation2 + $0x128] sm:$0xff]
    %v1415 = vld [vmem:[#allocation2 + $0x130] sm:$0xff]
    %v1416 = vld [vmem:[#allocation2 + $0x138] sm:$0xff]
    %v1417 = vld [vmem:[#allocation2 + $0x140] sm:$0x1]
    %v1418 = vlaneseq
    %v1419 = vshrl.u32 %v1418, 7
    %v1420 = vsub.s32 0, %v1419
    %v1421 = vrot.slane %v1417, %v1420
    %v1423 = vsel %vm132, %v1412, 0
    %1425 = vmatprep.subr.mxu0 0.0
    %1426 = vmatpush1.msra.mxu0 %v1413
    %1427 = vmatprep.subr.mxu0 0.0
    %1428 = vmatpush1.msra.mxu0 %v1414
    %1429 = vmatprep.subr.mxu0 0.0
    %1430 = vmatpush1.msra.mxu0 %v1415
    %1431 = vmatprep.subr.mxu0 0.0
    %1432 = vmatpush1.msra.mxu0 %v1416
    %1433 = vmatprep.subr.mxu0 0.0
    %1434 = vmatpush1.msra.mxu0 0.0
    %1435 = vmatprep.subr.mxu0 0.0
    %1436 = vmatpush1.msra.mxu0 0.0
    %1437 = vmatprep.subr.mxu0 0.0
    %1438 = vmatpush1.msra.mxu0 0.0
    %1439 = vmatprep.subr.mxu0 0.0
    %1440 = vmatpush1.msra.mxu0 0.0
    %1441 = vmatprep.subr.mxu0 0.0
    %1442 = vmatpush1.msra.mxu0 0.0
    %1443 = vmatprep.subr.mxu0 0.0
    %1444 = vmatpush1.msra.mxu0 0.0
    %1445 = vmatprep.subr.mxu0 0.0
    %1446 = vmatpush1.msra.mxu0 0.0
    %1447 = vmatprep.subr.mxu0 0.0
    %1448 = vmatpush1.msra.mxu0 0.0
    %1449 = vmatprep.subr.mxu0 0.0
    %1450 = vmatpush1.msra.mxu0 0.0
    %1451 = vmatprep.subr.mxu0 0.0
    %1452 = vmatpush1.msra.mxu0 0.0
    %1453 = vmatprep.subr.mxu0 0.0
    %1454 = vmatpush1.msra.mxu0 0.0
    %1455 = vmatprep.subr.mxu0 0.0
    %1456 = vmatpush1.msra.mxu0 0.0
    %1457 = vmatprep.subr.mxu0 0.0
    %1458 = vmatpush1.msra.mxu0 0.0
    %1459 = vmatprep.subr.mxu0 0.0
    %1460 = vmatpush1.msra.mxu0 0.0
    %1461 = vmatprep.subr.mxu0 0.0
    %1462 = vmatpush1.msra.mxu0 0.0
    %1463 = vmatprep.subr.mxu0 0.0
    %1464 = vmatpush1.msra.mxu0 0.0
    %1465 = vmatprep.subr.mxu0 0.0
    %1466 = vmatpush1.msra.mxu0 0.0
    %1467 = vmatprep.subr.mxu0 0.0
    %1468 = vmatpush1.msra.mxu0 0.0
    %1469 = vmatprep.subr.mxu0 0.0
    %1470 = vmatpush1.msra.mxu0 0.0
    %1471 = vmatprep.subr.mxu0 0.0
    %1472 = vmatpush1.msra.mxu0 0.0
    %1473 = vmatprep.subr.mxu0 0.0
    %1474 = vmatpush1.msra.mxu0 0.0
    %1475 = vmatprep.subr.mxu0 0.0
    %1476 = vmatpush1.msra.mxu0 0.0
    %1477 = vmatprep.subr.mxu0 0.0
    %1478 = vmatpush1.msra.mxu0 0.0
    %1479 = vmatprep.subr.mxu0 0.0
    %1480 = vmatpush1.msra.mxu0 0.0
    %1481 = vmatprep.subr.mxu0 0.0
    %1482 = vmatpush1.msra.mxu0 0.0
    %1483 = vmatprep.subr.mxu0 0.0
    %1484 = vmatpush1.msra.mxu0 0.0
    %1485 = vmatprep.subr.mxu0 0.0
    %1486 = vmatpush1.msra.mxu0 0.0
    %1487 = vmatprep.subr.mxu0 0.0
    %1488 = vmatpush1.msra.mxu0 0.0
    %1489 = vmatprep.mubr.f32.mxu0 0.0
    %1490 = vmatmul.mubr.f32.gmra.mrb[0].mxu0 %v1423
    %v1491 = vpop.f32.mrb[0].mxu0
    %v1492 = vadd.f32 %v1421, %v1491
    %v1493 = vpop.f32.mrb[0].mxu0
    %1494 = vdwg.mxu0
    %v1495 = vmax.f32 %v1492, 0.0
    %v1496 = vld [vmem:[#allocation2 + $0x148] sm:$0xff]
    %v1497 = vld [vmem:[#allocation2 + $0x150] sm:$0xff]
    %v1498 = vld [vmem:[#allocation2 + $0x158] sm:$0xff]
    %v1499 = vld [vmem:[#allocation2 + $0x160] sm:$0xff]
    %v1500 = vld [vmem:[#allocation2 + $0x168] sm:$0x1]
    %v1501 = vlaneseq
    %v1502 = vshrl.u32 %v1501, 7
    %v1503 = vsub.s32 0, %v1502
    %v1504 = vrot.slane %v1500, %v1503
    %v1506 = vsel %vm132, %v1495, 0
    %1508 = vmatprep.subr.mxu0 0.0
    %1509 = vmatpush1.msra.mxu0 %v1496
    %1510 = vmatprep.subr.mxu0 0.0
    %1511 = vmatpush1.msra.mxu0 %v1497
    %1512 = vmatprep.subr.mxu0 0.0
    %1513 = vmatpush1.msra.mxu0 %v1498
    %1514 = vmatprep.subr.mxu0 0.0
    %1515 = vmatpush1.msra.mxu0 %v1499
    %1516 = vmatprep.subr.mxu0 0.0
    %1517 = vmatpush1.msra.mxu0 0.0
    %1518 = vmatprep.subr.mxu0 0.0
    %1519 = vmatpush1.msra.mxu0 0.0
    %1520 = vmatprep.subr.mxu0 0.0
    %1521 = vmatpush1.msra.mxu0 0.0
    %1522 = vmatprep.subr.mxu0 0.0
    %1523 = vmatpush1.msra.mxu0 0.0
    %1524 = vmatprep.subr.mxu0 0.0
    %1525 = vmatpush1.msra.mxu0 0.0
    %1526 = vmatprep.subr.mxu0 0.0
    %1527 = vmatpush1.msra.mxu0 0.0
    %1528 = vmatprep.subr.mxu0 0.0
    %1529 = vmatpush1.msra.mxu0 0.0
    %1530 = vmatprep.subr.mxu0 0.0
    %1531 = vmatpush1.msra.mxu0 0.0
    %1532 = vmatprep.subr.mxu0 0.0
    %1533 = vmatpush1.msra.mxu0 0.0
    %1534 = vmatprep.subr.mxu0 0.0
    %1535 = vmatpush1.msra.mxu0 0.0
    %1536 = vmatprep.subr.mxu0 0.0
    %1537 = vmatpush1.msra.mxu0 0.0
    %1538 = vmatprep.subr.mxu0 0.0
    %1539 = vmatpush1.msra.mxu0 0.0
    %1540 = vmatprep.subr.mxu0 0.0
    %1541 = vmatpush1.msra.mxu0 0.0
    %1542 = vmatprep.subr.mxu0 0.0
    %1543 = vmatpush1.msra.mxu0 0.0
    %1544 = vmatprep.subr.mxu0 0.0
    %1545 = vmatpush1.msra.mxu0 0.0
    %1546 = vmatprep.subr.mxu0 0.0
    %1547 = vmatpush1.msra.mxu0 0.0
    %1548 = vmatprep.subr.mxu0 0.0
    %1549 = vmatpush1.msra.mxu0 0.0
    %1550 = vmatprep.subr.mxu0 0.0
    %1551 = vmatpush1.msra.mxu0 0.0
    %1552 = vmatprep.subr.mxu0 0.0
    %1553 = vmatpush1.msra.mxu0 0.0
    %1554 = vmatprep.subr.mxu0 0.0
    %1555 = vmatpush1.msra.mxu0 0.0
    %1556 = vmatprep.subr.mxu0 0.0
    %1557 = vmatpush1.msra.mxu0 0.0
    %1558 = vmatprep.subr.mxu0 0.0
    %1559 = vmatpush1.msra.mxu0 0.0
    %1560 = vmatprep.subr.mxu0 0.0
    %1561 = vmatpush1.msra.mxu0 0.0
    %1562 = vmatprep.subr.mxu0 0.0
    %1563 = vmatpush1.msra.mxu0 0.0
    %1564 = vmatprep.subr.mxu0 0.0
    %1565 = vmatpush1.msra.mxu0 0.0
    %1566 = vmatprep.subr.mxu0 0.0
    %1567 = vmatpush1.msra.mxu0 0.0
    %1568 = vmatprep.subr.mxu0 0.0
    %1569 = vmatpush1.msra.mxu0 0.0
    %1570 = vmatprep.subr.mxu0 0.0
    %1571 = vmatpush1.msra.mxu0 0.0
    %1572 = vmatprep.mubr.f32.mxu0 0.0
    %1573 = vmatmul.mubr.f32.gmra.mrb[0].mxu0 %v1506
    %v1574 = vpop.f32.mrb[0].mxu0
    %v1575 = vadd.f32 %v1504, %v1574
    %v1576 = vpop.f32.mrb[0].mxu0
    %1577 = vdwg.mxu0
    %1579 = vrot.lane.b32.xlu0 %v1575, 64
    %v1580 = vpop.permute.xlu0 %1579
    %v1582 = vsel %vm1338, %v1324, %v1580
    %1583 = vst [vmem:[%s3] sm:$0xf] %v1582
    // Predicated region
    $region18: #{forward.1} parent=1 // pred_check
      _
    $region19: #{forward.1} parent=1 // pred_check_branch
      %1585 = sbr.rel (0) target = $region21
    $region20: #{forward.1} parent=1 // pred_region
      _
    $region21: #{forward.1} parent=1 // pred_fallthru
      _
    // Predicated region
    $region22: #{forward.1} parent=1 // pred_check
      _
    $region23: #{forward.1} parent=1 // pred_check_branch
      %1587 = sbr.rel (0) target = $region25
    $region24: #{forward.1} parent=1 // pred_region
      _
    $region25: #{forward.1} parent=1 // pred_fallthru
      _
    %1588 = vsyncpa [#allocation3], 1

</llo_original>
